<compile_context>
chip_gen: v6e
topology: v6e:2x2x1
jax: 0.10.0
libtpu: 0.0.40
codegen_flags: <defaults>
</compile_context>

<pallas_src>
import functools

import jax
import jax.numpy as jnp
from jax import lax
from jax.experimental import pallas as pl
from jax.experimental.pallas import tpu as pltpu


CIN1_PAD = 8            # conv1 input channels padded 3 -> 8
C1 = 32                 # conv1 output channels (real; NOT padded)
C2 = 64                 # conv2 output channels = features_dim fed to GeM / Linear
FC_OUT = 32             # fc_output_dim
CPAD = 128              # lane width of the final FC output (lane-dense store)
GEM_EPS = 1e-6
K1 = 4 * 4 * CIN1_PAD   # conv1 GEMM contraction: 4 window taps x 4 s2d phases x 8 ch = 128


# ----------------------------------------------------------------------------
# Fused Pallas kernel: conv1 + conv2 + GeM + L2Norm + Linear + L2Norm (one image)
# ----------------------------------------------------------------------------
def _fused_geoloc_kernel(is3_ref, x1_ref, w1_ref, b1_ref, w2_ref, b2_ref, p_ref,
                         fcw_ref, fcb_ref, o_ref, x2_ref, gem_ref, *, oh2):
    """One image per grid step.

    x1_ref : (1, 4*oh2*oh2*4, K1) bf16  conv1 GEMM LHS, rows phase-major (see wrapper)
    w1_ref : (K1, C1)             bf16  conv1 weights (taps folded into K)
    b1_ref : (1, C1)              f32
    w2_ref : (2, 2, 4*C1, C2)     bf16  conv2 weights in space-to-depth window form
    b2_ref : (1, C2)              f32
    p_ref  : (1, C2)              f32   GeM p broadcast across lanes
    fcw_ref: (C2, CPAD)           bf16  Linear weight, cols >= FC_OUT zero
    fcb_ref: (1, CPAD)            f32   lanes >= FC_OUT zero
    o_ref  : (1, 1, CPAD)         f32
    x2_ref : VMEM (oh2+1, oh2+1, 4*C1) f32  conv2 space-to-depth input (zero-padded ring)
    gem_ref: VMEM (1, C2)         f32       GeM power-sum
    """
    m2 = oh2 * oh2            # conv2 output positions (16)
    k2 = 4 * C1               # conv2 contraction (128)

    # ---- conv1: one whole-image GEMM, bias + ReLU epilogue in f32 ----
    y1 = jnp.dot(x1_ref[0], w1_ref[...], preferred_element_type=jnp.float32)
    y1 = jnp.maximum(y1 + b1_ref[...], 0.0)                     # (4*m2, C1), phase-major rows

    # ---- scatter the 4 phase blocks into the zero-padded space-to-depth scratch ----
    # rows [0:16]  = h1[0::2, 0::2] -> x2[0:4, 0:4, 3*C1:4*C1]   (phase a=1,b=1)
    # rows [16:32] = h1[0::2, 1::2] -> x2[0:4, 1:5, 2*C1:3*C1]   (phase a=1,b=0)
    # rows [32:48] = h1[1::2, 0::2] -> x2[1:5, 0:4, 1*C1:2*C1]   (phase a=0,b=1)
    # rows [48:64] = h1[1::2, 1::2] -> x2[1:5, 1:5, 0*C1:1*C1]   (phase a=0,b=0)
    x2_ref[...] = jnp.zeros_like(x2_ref)
    x2_ref[0:oh2, 0:oh2, 3 * C1:4 * C1] = y1[0 * m2:1 * m2].reshape(oh2, oh2, C1)
    x2_ref[0:oh2, 1:oh2 + 1, 2 * C1:3 * C1] = y1[1 * m2:2 * m2].reshape(oh2, oh2, C1)
    x2_ref[1:oh2 + 1, 0:oh2, 1 * C1:2 * C1] = y1[2 * m2:3 * m2].reshape(oh2, oh2, C1)
    x2_ref[1:oh2 + 1, 1:oh2 + 1, 0:C1] = y1[3 * m2:4 * m2].reshape(oh2, oh2, C1)

    # ---- conv2: 4 whole-image window GEMMs (m2, 4*C1) @ (4*C1, C2) ----
    acc = jnp.zeros((m2, C2), jnp.float32)
    for ri in range(2):
        for rj in range(2):
            a = x2_ref[ri:ri + oh2, rj:rj + oh2, :].reshape(m2, k2).astype(jnp.bfloat16)
            acc += jnp.dot(a, w2_ref[ri, rj], preferred_element_type=jnp.float32)
    feat = jnp.maximum(acc + b2_ref[...], 0.0)                  # (m2, C2) f32

    # ---- GeM: mean over spatial of clamp(x, eps)^p, then ^(1/p)  (p==3 specialised) ----
    xc = jnp.maximum(feat, GEM_EPS)
    p = p_ref[...]                                              # (1, C2)
    is3 = is3_ref[0]

    @pl.when(is3 != 0)
    def _():
        gem_ref[...] = jnp.sum(xc * xc * xc, axis=0, keepdims=True)

    @pl.when(is3 == 0)
    def _():
        gem_ref[...] = jnp.sum(jnp.exp(jnp.log(xc) * p), axis=0, keepdims=True)

    pooled_p = gem_ref[...] * (1.0 / m2)                        # fold 1/HW (mean)
    pooled = jnp.exp(jnp.log(pooled_p) / p)                     # ^(1/p), (1, C2)

    # L2 normalise over the C2 real channels (F.normalize eps) via rsqrt
    ssq = jnp.sum(pooled * pooled, axis=-1, keepdims=True)
    pooled = pooled * lax.rsqrt(jnp.maximum(ssq, 1e-24))

    # Linear(C2 -> FC_OUT, padded to CPAD lanes) + final L2 norm
    # (padded fcw columns and fcb lanes are zero => padded lanes of z stay zero)
    z = jnp.dot(pooled.astype(jnp.bfloat16), fcw_ref[...],
                preferred_element_type=jnp.float32) + fcb_ref[...]
    ssq2 = jnp.sum(z * z, axis=-1, keepdims=True)
    z = z * lax.rsqrt(jnp.maximum(ssq2, 1e-24))
    o_ref[...] = z.reshape(1, 1, CPAD)


# ----------------------------------------------------------------------------
# pallas_call wrapper
# ----------------------------------------------------------------------------
def _fused_forward(prep, x1, *, oh2):
    n, m1, k1 = x1.shape
    grid_spec = pltpu.PrefetchScalarGridSpec(
        num_scalar_prefetch=1,
        grid=(n,),
        in_specs=[
            pl.BlockSpec((1, m1, k1), lambda i, is3: (i, 0, 0)),            # conv1 LHS
            pl.BlockSpec((k1, C1), lambda i, is3: (0, 0)),                   # w1
            pl.BlockSpec((1, C1), lambda i, is3: (0, 0)),                    # b1
            pl.BlockSpec((2, 2, 4 * C1, C2), lambda i, is3: (0, 0, 0, 0)),   # w2
            pl.BlockSpec((1, C2), lambda i, is3: (0, 0)),                    # b2
            pl.BlockSpec((1, C2), lambda i, is3: (0, 0)),                    # GeM p
            pl.BlockSpec((C2, CPAD), lambda i, is3: (0, 0)),                 # fc w
            pl.BlockSpec((1, CPAD), lambda i, is3: (0, 0)),                  # fc b
        ],
        out_specs=pl.BlockSpec((1, 1, CPAD), lambda i, is3: (i, 0, 0)),
        scratch_shapes=[
            pltpu.VMEM((oh2 + 1, oh2 + 1, 4 * C1), jnp.float32),   # conv2 s2d input
            pltpu.VMEM((1, C2), jnp.float32),                      # GeM power-sum
        ],
    )
    return pl.pallas_call(
        functools.partial(_fused_geoloc_kernel, oh2=oh2),
        out_shape=jax.ShapeDtypeStruct((n, 1, CPAD), jnp.float32),
        grid_spec=grid_spec,
        compiler_params=pltpu.CompilerParams(dimension_semantics=("parallel",)),
    )(prep["p_is3"], x1, prep["w1"], prep["b1"], prep["w2"], prep["b2"],
      prep["p_vec"], prep["fcw"], prep["fcb"])


# ----------------------------------------------------------------------------
# Layout plumbing (plain JAX, done once per forward on a tiny input)
# ----------------------------------------------------------------------------
def _pack_conv1_lhs(x):
    """(N, 3, H, W) NCHW f32 -> (N, (H/2)*(W/2), K1) bf16 conv1 GEMM LHS.

    Channel layout: [tap(0,0) | tap(0,1) | tap(1,0) | tap(1,1)], each tap block holding
    the 4 space-to-depth phases x CIN1_PAD padded input channels.  Rows are ordered
    phase-major w.r.t. the conv1 OUTPUT grid, (r%2, c%2, r//2, c//2), so that the GEMM
    result splits into 4 contiguous blocks scattered into the conv2 scratch in-kernel.
    """
    n, cin, h, w = x.shape
    assert h == w and h % 4 == 0, (h, w)
    x = jnp.transpose(x, (0, 2, 3, 1))                                   # NHWC
    x = jnp.pad(x, ((0, 0), (0, 0), (0, 0), (0, CIN1_PAD - cin)))        # pad ch 3 -> 8
    x = jnp.pad(x, ((0, 0), (1, 1), (1, 1), (0, 0)))                     # conv padding
    hp, wp = h + 2, w + 2
    s2d = x.reshape(n, hp // 2, 2, wp // 2, 2, CIN1_PAD)
    s2d = s2d.transpose(0, 1, 3, 2, 4, 5).reshape(n, hp // 2, wp // 2, 4 * CIN1_PAD)
    oh1 = h // 2
    taps = [s2d[:, ri:ri + oh1, rj:rj + oh1, :] for ri in range(2) for rj in range(2)]
    lhs = jnp.concatenate(taps, axis=-1)                                 # (N, oh1, oh1, K1)
    lhs = lhs.reshape(n, oh1 // 2, 2, oh1 // 2, 2, K1)
    lhs = lhs.transpose(0, 2, 4, 1, 3, 5)                                # (N, pr, pc, i, j, K1)
    return lhs.reshape(n, oh1 * oh1, K1).astype(jnp.bfloat16)


def pack_conv3x3_s2_weights(w, cin_pad, cout_pad):
    """PyTorch (Cout, Cin, 3, 3) stride-2 conv weights -> space-to-depth window GEMM form
    (2, 2, 4*cin_pad, cout_pad); unused taps / padded channels are zero."""
    cout, cin, kh, kw = w.shape
    wp = jnp.zeros((2, 2, 4 * cin_pad, cout_pad), jnp.float32)
    for di in range(kh):
        for dj in range(kw):
            ri, a = di // 2, di % 2
            rj, b = dj // 2, dj % 2
            ch0 = (2 * a + b) * cin_pad
            wp = wp.at[ri, rj, ch0:ch0 + cin, :cout].set(w[:, :, di, dj].T)
    return wp


# ----------------------------------------------------------------------------
# Parameters (torch layouts) and one-time repacking into kernel-friendly form
# ----------------------------------------------------------------------------
def init_params(key):
    k1, k2, k3, k4, k5, k6 = jax.random.split(key, 6)
    return {
        # backbone (stand-in for the truncated pretrained backbone)
        "conv1_w": 0.1 * jax.random.normal(k1, (C1, 3, 3, 3), jnp.float32),
        "conv1_b": 0.01 * jax.random.normal(k2, (C1,), jnp.float32),
        "conv2_w": 0.1 * jax.random.normal(k3, (C2, C1, 3, 3), jnp.float32),
        "conv2_b": 0.01 * jax.random.normal(k4, (C2,), jnp.float32),
        # aggregation.GeM learnable p (init = 3.0, as in the reference repo)
        "gem_p": jnp.full((1,), 3.0, jnp.float32),
        # fc head: Linear(features_dim=64 -> 32), torch (out, in) layout
        "fc_w": 0.1 * jax.random.normal(k5, (FC_OUT, C2), jnp.float32),
        "fc_b": 0.01 * jax.random.normal(k6, (FC_OUT,), jnp.float32),
    }


def prepare_params(params):
    """Pack / pad torch-layout parameters into lane-dense, MXU-friendly buffers."""
    w1p = pack_conv3x3_s2_weights(params["conv1_w"], CIN1_PAD, C1)      # (2,2,32,32)
    w2p = pack_conv3x3_s2_weights(params["conv2_w"], C1, C2)            # (2,2,128,64)
    return {
        "w1": w1p.reshape(K1, C1).astype(jnp.bfloat16),                  # taps folded into K
        "b1": params["conv1_b"].reshape(1, C1).astype(jnp.float32),
        "w2": w2p.astype(jnp.bfloat16),
        "b2": params["conv2_b"].reshape(1, C2).astype(jnp.float32),
        "fcw": jnp.zeros((C2, CPAD), jnp.float32)
                 .at[:, :FC_OUT].set(params["fc_w"].T).astype(jnp.bfloat16),
        "fcb": jnp.zeros((1, CPAD), jnp.float32).at[0, :FC_OUT].set(params["fc_b"]),
        "p_vec": jnp.broadcast_to(params["gem_p"].reshape(1, 1), (1, C2)).astype(jnp.float32),
        # exact-equality fast-path flag (perf cliff if p is learned away from 3.0)
        "p_is3": (params["gem_p"] == 3.0).astype(jnp.int32),
    }


# ----------------------------------------------------------------------------
# GeoLocalizationNet forward
# ----------------------------------------------------------------------------
@jax.jit
def geo_localization_net(prep, x):
    """x: (N, 3, H, W) float32 NCHW -> (N, FC_OUT) L2-normalized descriptors."""
    h = x.shape[2]
    x1 = _pack_conv1_lhs(x)                   # (N, (H/2)^2, 128) bf16
    out = _fused_forward(prep, x1, oh2=h // 4)  # (N, 1, 128) f32
    return out[:, 0, :FC_OUT]


# ----------------------------------------------------------------------------
# Pure-JAX reference (for correctness checking only)
# ----------------------------------------------------------------------------
def reference_forward(params, x):
    xh = jnp.transpose(x, (0, 2, 3, 1))

    def conv_s2_relu(inp, w, b):
        out = lax.conv_general_dilated(
            inp, jnp.transpose(w, (2, 3, 1, 0)), window_strides=(2, 2),
            padding=((1, 1), (1, 1)), dimension_numbers=("NHWC", "HWIO", "NHWC"))
        return jnp.maximum(out + b, 0.0)

    h1 = conv_s2_relu(xh, params["conv1_w"], params["conv1_b"])
    h2 = conv_s2_relu(h1, params["conv2_w"], params["conv2_b"])
    p = params["gem_p"][0]
    pooled = jnp.mean(jnp.maximum(h2, GEM_EPS) ** p, axis=(1, 2)) ** (1.0 / p)
    pooled = pooled / jnp.maximum(jnp.linalg.norm(pooled, axis=-1, keepdims=True), 1e-12)
    z = pooled @ params["fc_w"].T + params["fc_b"]
    return z / jnp.maximum(jnp.linalg.norm(z, axis=-1, keepdims=True), 1e-12)


if __name__ == "__main__":
    key = jax.random.PRNGKey(0)
    kx, kp = jax.random.split(key)
    x = jax.random.normal(kx, (2, 3, 16, 16), jnp.float32)         # NCHW, like PyTorch
    params = init_params(kp)
    prep = prepare_params(params)

    out = geo_localization_net(prep, x)
    jax.block_until_ready(out)

    assert out.shape == (2, FC_OUT), out.shape
    ref = reference_forward(params, x)
    err = float(jnp.max(jnp.abs(out - ref)))
    assert err < 5e-2, f"max |pallas - reference| = {err}"
    norms = jnp.linalg.norm(out, axis=1)
    assert bool(jnp.all(jnp.abs(norms - 1.0) < 1e-4)), norms
    assert bool(jnp.all(jnp.isfinite(out)))
    print("KERNEL_OK")
</pallas_src>

<mosaic_0001>
module attributes {stable_mosaic.version = 11 : i64} {
  func.func @_fused_geoloc_kernel(%arg0: i32, %arg1: memref<1xi32, #tpu.memory_space<smem>>, %arg2: memref<1x64x128xbf16, #tpu.memory_space<vmem>>, %arg3: memref<128x32xbf16, #tpu.memory_space<vmem>>, %arg4: memref<1x32xf32, #tpu.memory_space<vmem>>, %arg5: memref<2x2x128x64xbf16, #tpu.memory_space<vmem>>, %arg6: memref<1x64xf32, #tpu.memory_space<vmem>>, %arg7: memref<1x64xf32, #tpu.memory_space<vmem>>, %arg8: memref<64x128xbf16, #tpu.memory_space<vmem>>, %arg9: memref<1x128xf32, #tpu.memory_space<vmem>>, %arg10: memref<1x1x128xf32, #tpu.memory_space<vmem>>, %arg11: memref<5x5x128xf32, #tpu.memory_space<vmem>>, %arg12: memref<1x64xf32, #tpu.memory_space<vmem>>) attributes {dimension_semantics = [#tpu.dimension_semantics<parallel>], iteration_bounds = array<i64: 2>, scalar_prefetch = 1 : i64, scratch_operands = 2 : i64, tpu.core_type = #tpu.core_type<tc>, window_params = [{transform_indices = @transform_0, window_bounds = array<i64: 1, 64, 128>}, {pipeline_mode = #tpu.pipeline_mode<synchronous>, transform_indices = @transform_1, window_bounds = array<i64: 128, 32>}, {pipeline_mode = #tpu.pipeline_mode<synchronous>, transform_indices = @transform_2, window_bounds = array<i64: 1, 32>}, {pipeline_mode = #tpu.pipeline_mode<synchronous>, transform_indices = @transform_3, window_bounds = array<i64: 2, 2, 128, 64>}, {pipeline_mode = #tpu.pipeline_mode<synchronous>, transform_indices = @transform_4, window_bounds = array<i64: 1, 64>}, {pipeline_mode = #tpu.pipeline_mode<synchronous>, transform_indices = @transform_5, window_bounds = array<i64: 1, 64>}, {pipeline_mode = #tpu.pipeline_mode<synchronous>, transform_indices = @transform_6, window_bounds = array<i64: 64, 128>}, {pipeline_mode = #tpu.pipeline_mode<synchronous>, transform_indices = @transform_7, window_bounds = array<i64: 1, 128>}, {transform_indices = @transform_8, window_bounds = array<i64: 1, 1, 128>}]} {
    %c0 = arith.constant 0 : index
    %c0_0 = arith.constant 0 : index
    %c0_1 = arith.constant 0 : index
    %0 = vector.load %arg2[%c0, %c0_0, %c0_1] : memref<1x64x128xbf16, #tpu.memory_space<vmem>>, vector<1x64x128xbf16>
    %1 = vector.shape_cast %0 : vector<1x64x128xbf16> to vector<64x128xbf16>
    %c0_2 = arith.constant 0 : index
    %c0_3 = arith.constant 0 : index
    %2 = vector.load %arg3[%c0_2, %c0_3] : memref<128x32xbf16, #tpu.memory_space<vmem>>, vector<128x32xbf16>
    %cst = arith.constant dense<0.000000e+00> : vector<64x32xf32>
    %3 = tpu.matmul %1, %2, %cst {dimension_numbers = #tpu.dot_dimension_numbers<[1], [0], [0], [1], [0, 0, 1, 1], [], []>} : vector<64x128xbf16>, vector<128x32xbf16>, vector<64x32xf32> -> vector<64x32xf32>
    %c0_4 = arith.constant 0 : index
    %c0_5 = arith.constant 0 : index
    %4 = vector.load %arg4[%c0_4, %c0_5] : memref<1x32xf32, #tpu.memory_space<vmem>>, vector<1x32xf32>
    %5 = vector.broadcast %4 : vector<1x32xf32> to vector<64x32xf32>
    %6 = arith.addf %3, %5 : vector<64x32xf32>
    %cst_6 = arith.constant 0.000000e+00 : f32
    %7 = vector.broadcast %cst_6 : f32 to vector<64x32xf32>
    %8 = arith.maximumf %6, %7 : vector<64x32xf32>
    %cst_7 = arith.constant 0.000000e+00 : f32
    %9 = vector.broadcast %cst_7 : f32 to vector<5x5x128xf32>
    %c0_8 = arith.constant 0 : index
    %c0_9 = arith.constant 0 : index
    %c0_10 = arith.constant 0 : index
    %10 = vector.load %arg11[%c0_8, %c0_9, %c0_10] : memref<5x5x128xf32, #tpu.memory_space<vmem>>, vector<5x5x128xf32>
    tpu.vector_store %arg11[%c0_8, %c0_9, %c0_10], %9 {strides = array<i32>} : memref<5x5x128xf32, #tpu.memory_space<vmem>>, vector<5x5x128xf32>,
    %11 = vector.extract_strided_slice %8 {offsets = [0, 0], sizes = [16, 32], strides = [1, 1]} : vector<64x32xf32> to vector<16x32xf32>
    %12 = vector.shape_cast %11 : vector<16x32xf32> to vector<4x4x32xf32>
    %c0_11 = arith.constant 0 : index
    %c0_12 = arith.constant 0 : index
    %c96 = arith.constant 96 : index
    %13 = vector.load %arg11[%c0_11, %c0_12, %c96] : memref<5x5x128xf32, #tpu.memory_space<vmem>>, vector<4x4x32xf32>
    tpu.vector_store %arg11[%c0_11, %c0_12, %c96], %12 {strides = array<i32>} : memref<5x5x128xf32, #tpu.memory_space<vmem>>, vector<4x4x32xf32>,
    %14 = vector.extract_strided_slice %8 {offsets = [16, 0], sizes = [16, 32], strides = [1, 1]} : vector<64x32xf32> to vector<16x32xf32>
    %15 = vector.shape_cast %14 : vector<16x32xf32> to vector<4x4x32xf32>
    %c0_13 = arith.constant 0 : index
    %c1 = arith.constant 1 : index
    %c64 = arith.constant 64 : index
    %16 = vector.load %arg11[%c0_13, %c1, %c64] : memref<5x5x128xf32, #tpu.memory_space<vmem>>, vector<4x4x32xf32>
    tpu.vector_store %arg11[%c0_13, %c1, %c64], %15 {strides = array<i32>} : memref<5x5x128xf32, #tpu.memory_space<vmem>>, vector<4x4x32xf32>,
    %17 = vector.extract_strided_slice %8 {offsets = [32, 0], sizes = [16, 32], strides = [1, 1]} : vector<64x32xf32> to vector<16x32xf32>
    %18 = vector.shape_cast %17 : vector<16x32xf32> to vector<4x4x32xf32>
    %c1_14 = arith.constant 1 : index
    %c0_15 = arith.constant 0 : index
    %c32 = arith.constant 32 : index
    %19 = vector.load %arg11[%c1_14, %c0_15, %c32] : memref<5x5x128xf32, #tpu.memory_space<vmem>>, vector<4x4x32xf32>
    tpu.vector_store %arg11[%c1_14, %c0_15, %c32], %18 {strides = array<i32>} : memref<5x5x128xf32, #tpu.memory_space<vmem>>, vector<4x4x32xf32>,
    %20 = vector.extract_strided_slice %8 {offsets = [48, 0], sizes = [16, 32], strides = [1, 1]} : vector<64x32xf32> to vector<16x32xf32>
    %21 = vector.shape_cast %20 : vector<16x32xf32> to vector<4x4x32xf32>
    %c1_16 = arith.constant 1 : index
    %c1_17 = arith.constant 1 : index
    %c0_18 = arith.constant 0 : index
    %22 = vector.load %arg11[%c1_16, %c1_17, %c0_18] : memref<5x5x128xf32, #tpu.memory_space<vmem>>, vector<4x4x32xf32>
    tpu.vector_store %arg11[%c1_16, %c1_17, %c0_18], %21 {strides = array<i32>} : memref<5x5x128xf32, #tpu.memory_space<vmem>>, vector<4x4x32xf32>,
    %cst_19 = arith.constant 0.000000e+00 : f32
    %23 = vector.broadcast %cst_19 : f32 to vector<16x64xf32>
    %c0_20 = arith.constant 0 : index
    %c0_21 = arith.constant 0 : index
    %c0_22 = arith.constant 0 : index
    %24 = vector.load %arg11[%c0_20, %c0_21, %c0_22] : memref<5x5x128xf32, #tpu.memory_space<vmem>>, vector<4x4x128xf32>
    %25 = vector.shape_cast %24 : vector<4x4x128xf32> to vector<16x128xf32>
    %26 = arith.truncf %25 : vector<16x128xf32> to vector<16x128xbf16>
    %c0_23 = arith.constant 0 : index
    %c0_24 = arith.constant 0 : index
    %c0_25 = arith.constant 0 : index
    %c0_26 = arith.constant 0 : index
    %27 = vector.load %arg5[%c0_23, %c0_24, %c0_25, %c0_26] : memref<2x2x128x64xbf16, #tpu.memory_space<vmem>>, vector<1x1x128x64xbf16>
    %28 = vector.shape_cast %27 : vector<1x1x128x64xbf16> to vector<128x64xbf16>
    %cst_27 = arith.constant dense<0.000000e+00> : vector<16x64xf32>
    %29 = tpu.matmul %26, %28, %cst_27 {dimension_numbers = #tpu.dot_dimension_numbers<[1], [0], [0], [1], [0, 0, 1, 1], [], []>} : vector<16x128xbf16>, vector<128x64xbf16>, vector<16x64xf32> -> vector<16x64xf32>
    %30 = arith.addf %23, %29 : vector<16x64xf32>
    %c0_28 = arith.constant 0 : index
    %c1_29 = arith.constant 1 : index
    %c0_30 = arith.constant 0 : index
    %31 = vector.load %arg11[%c0_28, %c1_29, %c0_30] : memref<5x5x128xf32, #tpu.memory_space<vmem>>, vector<4x4x128xf32>
    %32 = vector.shape_cast %31 : vector<4x4x128xf32> to vector<16x128xf32>
    %33 = arith.truncf %32 : vector<16x128xf32> to vector<16x128xbf16>
    %c0_31 = arith.constant 0 : index
    %c1_32 = arith.constant 1 : index
    %c0_33 = arith.constant 0 : index
    %c0_34 = arith.constant 0 : index
    %34 = vector.load %arg5[%c0_31, %c1_32, %c0_33, %c0_34] : memref<2x2x128x64xbf16, #tpu.memory_space<vmem>>, vector<1x1x128x64xbf16>
    %35 = vector.shape_cast %34 : vector<1x1x128x64xbf16> to vector<128x64xbf16>
    %cst_35 = arith.constant dense<0.000000e+00> : vector<16x64xf32>
    %36 = tpu.matmul %33, %35, %cst_35 {dimension_numbers = #tpu.dot_dimension_numbers<[1], [0], [0], [1], [0, 0, 1, 1], [], []>} : vector<16x128xbf16>, vector<128x64xbf16>, vector<16x64xf32> -> vector<16x64xf32>
    %37 = arith.addf %30, %36 : vector<16x64xf32>
    %c1_36 = arith.constant 1 : index
    %c0_37 = arith.constant 0 : index
    %c0_38 = arith.constant 0 : index
    %38 = vector.load %arg11[%c1_36, %c0_37, %c0_38] : memref<5x5x128xf32, #tpu.memory_space<vmem>>, vector<4x4x128xf32>
    %39 = vector.shape_cast %38 : vector<4x4x128xf32> to vector<16x128xf32>
    %40 = arith.truncf %39 : vector<16x128xf32> to vector<16x128xbf16>
    %c1_39 = arith.constant 1 : index
    %c0_40 = arith.constant 0 : index
    %c0_41 = arith.constant 0 : index
    %c0_42 = arith.constant 0 : index
    %41 = vector.load %arg5[%c1_39, %c0_40, %c0_41, %c0_42] : memref<2x2x128x64xbf16, #tpu.memory_space<vmem>>, vector<1x1x128x64xbf16>
    %42 = vector.shape_cast %41 : vector<1x1x128x64xbf16> to vector<128x64xbf16>
    %cst_43 = arith.constant dense<0.000000e+00> : vector<16x64xf32>
    %43 = tpu.matmul %40, %42, %cst_43 {dimension_numbers = #tpu.dot_dimension_numbers<[1], [0], [0], [1], [0, 0, 1, 1], [], []>} : vector<16x128xbf16>, vector<128x64xbf16>, vector<16x64xf32> -> vector<16x64xf32>
    %44 = arith.addf %37, %43 : vector<16x64xf32>
    %c1_44 = arith.constant 1 : index
    %c1_45 = arith.constant 1 : index
    %c0_46 = arith.constant 0 : index
    %45 = vector.load %arg11[%c1_44, %c1_45, %c0_46] : memref<5x5x128xf32, #tpu.memory_space<vmem>>, vector<4x4x128xf32>
    %46 = vector.shape_cast %45 : vector<4x4x128xf32> to vector<16x128xf32>
    %47 = arith.truncf %46 : vector<16x128xf32> to vector<16x128xbf16>
    %c1_47 = arith.constant 1 : index
    %c1_48 = arith.constant 1 : index
    %c0_49 = arith.constant 0 : index
    %c0_50 = arith.constant 0 : index
    %48 = vector.load %arg5[%c1_47, %c1_48, %c0_49, %c0_50] : memref<2x2x128x64xbf16, #tpu.memory_space<vmem>>, vector<1x1x128x64xbf16>
    %49 = vector.shape_cast %48 : vector<1x1x128x64xbf16> to vector<128x64xbf16>
    %cst_51 = arith.constant dense<0.000000e+00> : vector<16x64xf32>
    %50 = tpu.matmul %47, %49, %cst_51 {dimension_numbers = #tpu.dot_dimension_numbers<[1], [0], [0], [1], [0, 0, 1, 1], [], []>} : vector<16x128xbf16>, vector<128x64xbf16>, vector<16x64xf32> -> vector<16x64xf32>
    %51 = arith.addf %44, %50 : vector<16x64xf32>
    %c0_52 = arith.constant 0 : index
    %c0_53 = arith.constant 0 : index
    %52 = vector.load %arg6[%c0_52, %c0_53] : memref<1x64xf32, #tpu.memory_space<vmem>>, vector<1x64xf32>
    %53 = vector.broadcast %52 : vector<1x64xf32> to vector<16x64xf32>
    %54 = arith.addf %51, %53 : vector<16x64xf32>
    %cst_54 = arith.constant 0.000000e+00 : f32
    %55 = vector.broadcast %cst_54 : f32 to vector<16x64xf32>
    %56 = arith.maximumf %54, %55 : vector<16x64xf32>
    %cst_55 = arith.constant 9.99999997E-7 : f32
    %57 = vector.broadcast %cst_55 : f32 to vector<16x64xf32>
    %58 = arith.maximumf %56, %57 : vector<16x64xf32>
    %c0_56 = arith.constant 0 : index
    %c0_57 = arith.constant 0 : index
    %59 = vector.load %arg7[%c0_56, %c0_57] : memref<1x64xf32, #tpu.memory_space<vmem>>, vector<1x64xf32>
    %c0_58 = arith.constant 0 : index
    %60 = memref.load %arg1[%c0_58] : memref<1xi32, #tpu.memory_space<smem>>
    %c0_i32 = arith.constant 0 : i32
    %61 = arith.cmpi ne, %60, %c0_i32 : i32
    %62 = arith.extui %61 : i1 to i32
    %c0_i32_59 = arith.constant 0 : i32
    %63 = arith.cmpi ne, %62, %c0_i32_59 : i32
    scf.if %63 {
      %96 = arith.mulf %58, %58 : vector<16x64xf32>
      %97 = arith.mulf %96, %58 : vector<16x64xf32>
      %cst_77 = arith.constant dense<0.000000e+00> : vector<64xf32>
      %98 = vector.multi_reduction <add>, %97, %cst_77 [0] : vector<16x64xf32> to vector<64xf32>
      %99 = vector.shape_cast %98 : vector<64xf32> to vector<1x64xf32>
      %c0_78 = arith.constant 0 : index
      %c0_79 = arith.constant 0 : index
      %100 = vector.load %arg12[%c0_78, %c0_79] : memref<1x64xf32, #tpu.memory_space<vmem>>, vector<1x64xf32>
      tpu.vector_store %arg12[%c0_78, %c0_79], %99 {strides = array<i32>} : memref<1x64xf32, #tpu.memory_space<vmem>>, vector<1x64xf32>,
    } else {
    }
    %c0_i32_60 = arith.constant 0 : i32
    %64 = arith.cmpi eq, %60, %c0_i32_60 : i32
    %65 = arith.extui %64 : i1 to i32
    %c0_i32_61 = arith.constant 0 : i32
    %66 = arith.cmpi ne, %65, %c0_i32_61 : i32
    scf.if %66 {
      %96 = math.log %58 : vector<16x64xf32>
      %97 = vector.broadcast %59 : vector<1x64xf32> to vector<16x64xf32>
      %98 = arith.mulf %96, %97 : vector<16x64xf32>
      %99 = math.exp %98 : vector<16x64xf32>
      %cst_77 = arith.constant dense<0.000000e+00> : vector<64xf32>
      %100 = vector.multi_reduction <add>, %99, %cst_77 [0] : vector<16x64xf32> to vector<64xf32>
      %101 = vector.shape_cast %100 : vector<64xf32> to vector<1x64xf32>
      %c0_78 = arith.constant 0 : index
      %c0_79 = arith.constant 0 : index
      %102 = vector.load %arg12[%c0_78, %c0_79] : memref<1x64xf32, #tpu.memory_space<vmem>>, vector<1x64xf32>
      tpu.vector_store %arg12[%c0_78, %c0_79], %101 {strides = array<i32>} : memref<1x64xf32, #tpu.memory_space<vmem>>, vector<1x64xf32>,
    } else {
    }
    %c0_62 = arith.constant 0 : index
    %c0_63 = arith.constant 0 : index
    %67 = vector.load %arg12[%c0_62, %c0_63] : memref<1x64xf32, #tpu.memory_space<vmem>>, vector<1x64xf32>
    %cst_64 = arith.constant 6.250000e-02 : f32
    %68 = vector.broadcast %cst_64 : f32 to vector<1x64xf32>
    %69 = arith.mulf %67, %68 : vector<1x64xf32>
    %70 = math.log %69 : vector<1x64xf32>
    %71 = arith.divf %70, %59 : vector<1x64xf32>
    %72 = math.exp %71 : vector<1x64xf32>
    %73 = arith.mulf %72, %72 : vector<1x64xf32>
    %cst_65 = arith.constant dense<0.000000e+00> : vector<1xf32>
    %74 = vector.multi_reduction <add>, %73, %cst_65 [1] : vector<1x64xf32> to vector<1xf32>
    %75 = vector.shape_cast %74 : vector<1xf32> to vector<1x1xf32>
    %cst_66 = arith.constant 1.000000e-24 : f32
    %76 = vector.broadcast %cst_66 : f32 to vector<1x1xf32>
    %77 = arith.maximumf %75, %76 : vector<1x1xf32>
    %78 = math.rsqrt %77 : vector<1x1xf32>
    %79 = vector.broadcast %78 : vector<1x1xf32> to vector<1x64xf32>
    %80 = arith.mulf %72, %79 : vector<1x64xf32>
    %81 = arith.truncf %80 : vector<1x64xf32> to vector<1x64xbf16>
    %c0_67 = arith.constant 0 : index
    %c0_68 = arith.constant 0 : index
    %82 = vector.load %arg8[%c0_67, %c0_68] : memref<64x128xbf16, #tpu.memory_space<vmem>>, vector<64x128xbf16>
    %cst_69 = arith.constant dense<0.000000e+00> : vector<1x128xf32>
    %83 = tpu.matmul %81, %82, %cst_69 {dimension_numbers = #tpu.dot_dimension_numbers<[1], [0], [0], [1], [0, 0, 1, 1], [], []>} : vector<1x64xbf16>, vector<64x128xbf16>, vector<1x128xf32> -> vector<1x128xf32>
    %c0_70 = arith.constant 0 : index
    %c0_71 = arith.constant 0 : index
    %84 = vector.load %arg9[%c0_70, %c0_71] : memref<1x128xf32, #tpu.memory_space<vmem>>, vector<1x128xf32>
    %85 = arith.addf %83, %84 : vector<1x128xf32>
    %86 = arith.mulf %85, %85 : vector<1x128xf32>
    %cst_72 = arith.constant dense<0.000000e+00> : vector<1xf32>
    %87 = vector.multi_reduction <add>, %86, %cst_72 [1] : vector<1x128xf32> to vector<1xf32>
    %88 = vector.shape_cast %87 : vector<1xf32> to vector<1x1xf32>
    %cst_73 = arith.constant 1.000000e-24 : f32
    %89 = vector.broadcast %cst_73 : f32 to vector<1x1xf32>
    %90 = arith.maximumf %88, %89 : vector<1x1xf32>
    %91 = math.rsqrt %90 : vector<1x1xf32>
    %92 = vector.broadcast %91 : vector<1x1xf32> to vector<1x128xf32>
    %93 = arith.mulf %85, %92 : vector<1x128xf32>
    %94 = vector.shape_cast %93 : vector<1x128xf32> to vector<1x1x128xf32>
    %c0_74 = arith.constant 0 : index
    %c0_75 = arith.constant 0 : index
    %c0_76 = arith.constant 0 : index
    %95 = vector.load %arg10[%c0_74, %c0_75, %c0_76] : memref<1x1x128xf32, #tpu.memory_space<vmem>>, vector<1x1x128xf32>
    tpu.vector_store %arg10[%c0_74, %c0_75, %c0_76], %94 {strides = array<i32>} : memref<1x1x128xf32, #tpu.memory_space<vmem>>, vector<1x1x128xf32>,
    return
  }
  func.func @transform_0(%arg0: i32, %arg1: memref<1xi32, #tpu.memory_space<smem>>) -> (i32, i32, i32) {
    %c0_i32 = arith.constant 0 : i32
    %c0_i32_0 = arith.constant 0 : i32
    %c0_i32_1 = arith.constant 0 : i32
    return %arg0, %c0_i32, %c0_i32_0 : i32, i32, i32
  }
  func.func @transform_1(%arg0: i32, %arg1: memref<1xi32, #tpu.memory_space<smem>>) -> (i32, i32) {
    %c0_i32 = arith.constant 0 : i32
    %c0_i32_0 = arith.constant 0 : i32
    %c0_i32_1 = arith.constant 0 : i32
    return %c0_i32, %c0_i32_0 : i32, i32
  }
  func.func @transform_2(%arg0: i32, %arg1: memref<1xi32, #tpu.memory_space<smem>>) -> (i32, i32) {
    %c0_i32 = arith.constant 0 : i32
    %c0_i32_0 = arith.constant 0 : i32
    %c0_i32_1 = arith.constant 0 : i32
    return %c0_i32, %c0_i32_0 : i32, i32
  }
  func.func @transform_3(%arg0: i32, %arg1: memref<1xi32, #tpu.memory_space<smem>>) -> (i32, i32, i32, i32) {
    %c0_i32 = arith.constant 0 : i32
    %c0_i32_0 = arith.constant 0 : i32
    %c0_i32_1 = arith.constant 0 : i32
    %c0_i32_2 = arith.constant 0 : i32
    %c0_i32_3 = arith.constant 0 : i32
    return %c0_i32, %c0_i32_0, %c0_i32_1, %c0_i32_2 : i32, i32, i32, i32
  }
  func.func @transform_4(%arg0: i32, %arg1: memref<1xi32, #tpu.memory_space<smem>>) -> (i32, i32) {
    %c0_i32 = arith.constant 0 : i32
    %c0_i32_0 = arith.constant 0 : i32
    %c0_i32_1 = arith.constant 0 : i32
    return %c0_i32, %c0_i32_0 : i32, i32
  }
  func.func @transform_5(%arg0: i32, %arg1: memref<1xi32, #tpu.memory_space<smem>>) -> (i32, i32) {
    %c0_i32 = arith.constant 0 : i32
    %c0_i32_0 = arith.constant 0 : i32
    %c0_i32_1 = arith.constant 0 : i32
    return %c0_i32, %c0_i32_0 : i32, i32
  }
  func.func @transform_6(%arg0: i32, %arg1: memref<1xi32, #tpu.memory_space<smem>>) -> (i32, i32) {
    %c0_i32 = arith.constant 0 : i32
    %c0_i32_0 = arith.constant 0 : i32
    %c0_i32_1 = arith.constant 0 : i32
    return %c0_i32, %c0_i32_0 : i32, i32
  }
  func.func @transform_7(%arg0: i32, %arg1: memref<1xi32, #tpu.memory_space<smem>>) -> (i32, i32) {
    %c0_i32 = arith.constant 0 : i32
    %c0_i32_0 = arith.constant 0 : i32
    %c0_i32_1 = arith.constant 0 : i32
    return %c0_i32, %c0_i32_0 : i32, i32
  }
  func.func @transform_8(%arg0: i32, %arg1: memref<1xi32, #tpu.memory_space<smem>>) -> (i32, i32, i32) {
    %c0_i32 = arith.constant 0 : i32
    %c0_i32_0 = arith.constant 0 : i32
    %c0_i32_1 = arith.constant 0 : i32
    return %arg0, %c0_i32, %c0_i32_0 : i32, i32, i32
  }
}

</mosaic_0001>

<llo_original>
// kernel: geo_localization_net.1
$region0: #{geo_localization_net.1}
  #allocation0 [shape = 'u32[]', space=smem, size = 0x4, offset = 0x4, fixed_abs, tag = 'smem constant byte address 0x4 - core index']
  #allocation1 [shape = 'u32[144,128]{1,0:T(1,128)}', space=vmem, size = 0x12000, scoped, tag = 'internal scratch']
  #allocation2 [shape = 'f32[5,5,128]{2,1,0:T(8,128)}', space=vmem, size = 0x5000, scoped, tag = 'scratch operand']
  #allocation3 [shape = 'f32[1,64]{1,0:T(1,128)}', space=vmem, size = 0x200, scoped, tag = 'scratch operand']
  #allocation4 [shape = 's32[1]{0}', space=sflag, size = 0x4, scoped, tag = 'scoped memory for geo_localization_net.1']
  #allocation5 [shape = 's32[1]{0:T(128)S(6)}', space=smem, size = 0x200, scoped, tag = 'prefetched SMEM operand 0']
  %s0 = inlined_call_operand.<no memory space> [shape: s32[1], index: 0, kind: input, shape index: {}]
  %s1 = inlined_call_operand.vmem [shape: bf16[2,64,128], index: 1, kind: input, shape index: {}]
  %s2 = inlined_call_operand.vmem [shape: bf16[128,32], index: 2, kind: input, shape index: {}]
  %s3 = inlined_call_operand.vmem [shape: f32[1,32], index: 3, kind: input, shape index: {}]
  %s4 = inlined_call_operand.vmem [shape: bf16[2,2,128,64], index: 4, kind: input, shape index: {}]
  %s5 = inlined_call_operand.vmem [shape: f32[1,64], index: 5, kind: input, shape index: {}]
  %s6 = inlined_call_operand.vmem [shape: f32[1,64], index: 6, kind: input, shape index: {}]
  %s7 = inlined_call_operand.vmem [shape: bf16[64,128], index: 7, kind: input, shape index: {}]
  %s8 = inlined_call_operand.vmem [shape: f32[1,128], index: 8, kind: input, shape index: {}]
  %s9 = inlined_call_operand.hbm [shape: f32[2,1,128], index: 9, kind: output, shape index: {}]
  %s10 = sld [smem:[#allocation0]]
  $region73: #{geo_localization_net.1} parent=0
    _
  %s12 = ssub.s32 1, %s10
  %s13 = scalar_select 0, %s12, %s10
  %14 = sst [smem:[#allocation5]] %s0
  $region1: #{geo_localization_net.1} parent=0
    #allocation6 [shape = 'u8[1024]{0}', space=vmem, size = 0x400, scoped, tag = 'output window, operand 0']
    #allocation7 [shape = 's32[2]{0}', space=sflag, size = 0x8, scoped, tag = 'scoped memory for geo_localization_net.1']
    %15 = vsyncpa [#allocation7], 0
    %s16 = scalar_lea.sflag [#allocation7], 1
    %17 = vsyncpa %s16, 0
    loop: start=0, step=1, limit=4
    $region2: #{geo_localization_net.1} parent=1 // loop_pre_header
      _
    $region3: #{geo_localization_net.1} parent=1 // loop_header
      %s19 = sphi 0, %s23
      %p20 = scmp.ge.s32.totalorder %s19, 4
      %s29 = sphi 0, %s31
      %s32 = sphi 0, %s29
      %s33 = sphi 0, %s32
      %s49 = sphi 0, %s33
      %s53 = sphi 0, %s53
      %s55 = sphi 0, %s53
      %s56 = sphi 0, %s55
      %s70 = sphi 0, %s56
      %s74 = sphi 0, %s74
      %s76 = sphi 0, %s74
      %s77 = sphi 0, %s76
      %s91 = sphi 0, %s77
      %s95 = sphi 0, %s95
      %s97 = sphi 0, %s95
      %s98 = sphi 0, %s97
      %s112 = sphi 0, %s98
      %s116 = sphi 0, %s116
      %s118 = sphi 0, %s116
      %s119 = sphi 0, %s118
      %s133 = sphi 0, %s119
      %s137 = sphi 0, %s137
      %s139 = sphi 0, %s137
      %s140 = sphi 0, %s139
      %s154 = sphi 0, %s140
      %s158 = sphi 0, %s158
      %s160 = sphi 0, %s158
      %s161 = sphi 0, %s160
      %s175 = sphi 0, %s161
      %s179 = sphi 0, %s179
      %s181 = sphi 0, %s179
      %s182 = sphi 0, %s181
      %s196 = sphi 0, %s182
      %s202 = sphi 0, %s204
      %s205 = sphi 0, %s202
      %s206 = sphi 0, %s205
      %s222 = sphi 0, %s206
    $region4: #{geo_localization_net.1} parent=1 // loop_header_branch
      %22 = sbr.rel (%p20) target = $region8
    $region5: #{geo_localization_net.1} parent=1 // loop_body
      %s24 = ssub.s32 %s19, 1
      %s25 = ssub.s32 %s19, 2
      %s26 = sadd.s32 %s19, 1
      %s27 = ssub.s32 %s19, %s26
      %p28 = scmp.eq.s32.totalorder %s27, 0
      %s30 = sadd.s32 %s29, 1
      %s31 = scalar_select %p28, %s29, %s30
      %p34 = pneg %p28
      %p35 = scmp.eq.s32.totalorder %s19, 1
      %p36 = por %p34, %p35
      %p37 = scmp.ne.s32.totalorder %s29, %s32
      %p38 = scmp.eq.s32.totalorder %s19, 0
      %p39 = por %p37, %p38
      %p40 = scmp.ne.s32.totalorder %s29, %s32
      %p41 = scmp.eq.s32.totalorder %s24, 1
      %p42 = por %p40, %p41
      %p43 = scmp.ne.s32.totalorder %s32, %s33
      %p44 = scmp.eq.s32.totalorder %s24, 0
      %p45 = por %p43, %p44
      %p46 = scmp.ne.s32.totalorder %s32, %s33
      %p47 = scmp.eq.s32.totalorder %s25, 1
      %p48 = por %p46, %p47
      %p50 = scmp.ne.s32.totalorder %s33, %s49
      %p51 = scmp.eq.s32.totalorder %s25, 0
      %p52 = por %p50, %p51
      %s54 = sadd.s32 %s53, 1
      %p57 = scmp.eq.s32.totalorder %s19, 1
      %p58 = scmp.ne.s32.totalorder %s53, %s55
      %p59 = scmp.eq.s32.totalorder %s19, 0
      %p60 = por %p58, %p59
      %p61 = scmp.ne.s32.totalorder %s53, %s55
      %p62 = scmp.eq.s32.totalorder %s24, 1
      %p63 = por %p61, %p62
      %p64 = scmp.ne.s32.totalorder %s55, %s56
      %p65 = scmp.eq.s32.totalorder %s24, 0
      %p66 = por %p64, %p65
      %p67 = scmp.ne.s32.totalorder %s55, %s56
      %p68 = scmp.eq.s32.totalorder %s25, 1
      %p69 = por %p67, %p68
      %p71 = scmp.ne.s32.totalorder %s56, %s70
      %p72 = scmp.eq.s32.totalorder %s25, 0
      %p73 = por %p71, %p72
      %s75 = sadd.s32 %s74, 1
      %p78 = scmp.eq.s32.totalorder %s19, 1
      %p79 = scmp.ne.s32.totalorder %s74, %s76
      %p80 = scmp.eq.s32.totalorder %s19, 0
      %p81 = por %p79, %p80
      %p82 = scmp.ne.s32.totalorder %s74, %s76
      %p83 = scmp.eq.s32.totalorder %s24, 1
      %p84 = por %p82, %p83
      %p85 = scmp.ne.s32.totalorder %s76, %s77
      %p86 = scmp.eq.s32.totalorder %s24, 0
      %p87 = por %p85, %p86
      %p88 = scmp.ne.s32.totalorder %s76, %s77
      %p89 = scmp.eq.s32.totalorder %s25, 1
      %p90 = por %p88, %p89
      %p92 = scmp.ne.s32.totalorder %s77, %s91
      %p93 = scmp.eq.s32.totalorder %s25, 0
      %p94 = por %p92, %p93
      %s96 = sadd.s32 %s95, 1
      %p99 = scmp.eq.s32.totalorder %s19, 1
      %p100 = scmp.ne.s32.totalorder %s95, %s97
      %p101 = scmp.eq.s32.totalorder %s19, 0
      %p102 = por %p100, %p101
      %p103 = scmp.ne.s32.totalorder %s95, %s97
      %p104 = scmp.eq.s32.totalorder %s24, 1
      %p105 = por %p103, %p104
      %p106 = scmp.ne.s32.totalorder %s97, %s98
      %p107 = scmp.eq.s32.totalorder %s24, 0
      %p108 = por %p106, %p107
      %p109 = scmp.ne.s32.totalorder %s97, %s98
      %p110 = scmp.eq.s32.totalorder %s25, 1
      %p111 = por %p109, %p110
      %p113 = scmp.ne.s32.totalorder %s98, %s112
      %p114 = scmp.eq.s32.totalorder %s25, 0
      %p115 = por %p113, %p114
      %s117 = sadd.s32 %s116, 1
      %p120 = scmp.eq.s32.totalorder %s19, 1
      %p121 = scmp.ne.s32.totalorder %s116, %s118
      %p122 = scmp.eq.s32.totalorder %s19, 0
      %p123 = por %p121, %p122
      %p124 = scmp.ne.s32.totalorder %s116, %s118
      %p125 = scmp.eq.s32.totalorder %s24, 1
      %p126 = por %p124, %p125
      %p127 = scmp.ne.s32.totalorder %s118, %s119
      %p128 = scmp.eq.s32.totalorder %s24, 0
      %p129 = por %p127, %p128
      %p130 = scmp.ne.s32.totalorder %s118, %s119
      %p131 = scmp.eq.s32.totalorder %s25, 1
      %p132 = por %p130, %p131
      %p134 = scmp.ne.s32.totalorder %s119, %s133
      %p135 = scmp.eq.s32.totalorder %s25, 0
      %p136 = por %p134, %p135
      %s138 = sadd.s32 %s137, 1
      %p141 = scmp.eq.s32.totalorder %s19, 1
      %p142 = scmp.ne.s32.totalorder %s137, %s139
      %p143 = scmp.eq.s32.totalorder %s19, 0
      %p144 = por %p142, %p143
      %p145 = scmp.ne.s32.totalorder %s137, %s139
      %p146 = scmp.eq.s32.totalorder %s24, 1
      %p147 = por %p145, %p146
      %p148 = scmp.ne.s32.totalorder %s139, %s140
      %p149 = scmp.eq.s32.totalorder %s24, 0
      %p150 = por %p148, %p149
      %p151 = scmp.ne.s32.totalorder %s139, %s140
      %p152 = scmp.eq.s32.totalorder %s25, 1
      %p153 = por %p151, %p152
      %p155 = scmp.ne.s32.totalorder %s140, %s154
      %p156 = scmp.eq.s32.totalorder %s25, 0
      %p157 = por %p155, %p156
      %s159 = sadd.s32 %s158, 1
      %p162 = scmp.eq.s32.totalorder %s19, 1
      %p163 = scmp.ne.s32.totalorder %s158, %s160
      %p164 = scmp.eq.s32.totalorder %s19, 0
      %p165 = por %p163, %p164
      %p166 = scmp.ne.s32.totalorder %s158, %s160
      %p167 = scmp.eq.s32.totalorder %s24, 1
      %p168 = por %p166, %p167
      %p169 = scmp.ne.s32.totalorder %s160, %s161
      %p170 = scmp.eq.s32.totalorder %s24, 0
      %p171 = por %p169, %p170
      %p172 = scmp.ne.s32.totalorder %s160, %s161
      %p173 = scmp.eq.s32.totalorder %s25, 1
      %p174 = por %p172, %p173
      %p176 = scmp.ne.s32.totalorder %s161, %s175
      %p177 = scmp.eq.s32.totalorder %s25, 0
      %p178 = por %p176, %p177
      %s180 = sadd.s32 %s179, 1
      %p183 = scmp.eq.s32.totalorder %s19, 1
      %p184 = scmp.ne.s32.totalorder %s179, %s181
      %p185 = scmp.eq.s32.totalorder %s19, 0
      %p186 = por %p184, %p185
      %p187 = scmp.ne.s32.totalorder %s179, %s181
      %p188 = scmp.eq.s32.totalorder %s24, 1
      %p189 = por %p187, %p188
      %p190 = scmp.ne.s32.totalorder %s181, %s182
      %p191 = scmp.eq.s32.totalorder %s24, 0
      %p192 = por %p190, %p191
      %p193 = scmp.ne.s32.totalorder %s181, %s182
      %p194 = scmp.eq.s32.totalorder %s25, 1
      %p195 = por %p193, %p194
      %p197 = scmp.ne.s32.totalorder %s182, %s196
      %p198 = scmp.eq.s32.totalorder %s25, 0
      %p199 = por %p197, %p198
      %s200 = ssub.s32 %s19, %s26
      %p201 = scmp.eq.s32.totalorder %s200, 0
      %s203 = sadd.s32 %s202, 1
      %s204 = scalar_select %p201, %s202, %s203
      %p207 = pneg %p201
      %p208 = scmp.eq.s32.totalorder %s19, 1
      %p209 = por %p207, %p208
      %p210 = scmp.ne.s32.totalorder %s202, %s205
      %p211 = scmp.eq.s32.totalorder %s19, 0
      %p212 = por %p210, %p211
      %p213 = scmp.ne.s32.totalorder %s202, %s205
      %p214 = scmp.eq.s32.totalorder %s24, 1
      %p215 = por %p213, %p214
      %p216 = scmp.ne.s32.totalorder %s205, %s206
      %p217 = scmp.eq.s32.totalorder %s24, 0
      %p218 = por %p216, %p217
      %p219 = scmp.ne.s32.totalorder %s205, %s206
      %p220 = scmp.eq.s32.totalorder %s25, 1
      %p221 = por %p219, %p220
      %p223 = scmp.ne.s32.totalorder %s206, %s222
      %p224 = scmp.eq.s32.totalorder %s25, 0
      %p225 = por %p223, %p224
      %p226 = scmp.le.s32.totalorder 1, %s19
      %p227 = scmp.lt.s32.totalorder %s19, 3
      %p228 = pnand %p226, %p227
      %p229 = pneg %p228
      // Predicated region
      $region9: #{geo_localization_net.1} parent=5 // pred_check
        _
      $region10: #{geo_localization_net.1} parent=5 // pred_check_branch
        %231 = sbr.rel (%p228) target = $region12
      $region11: #{geo_localization_net.1} parent=5 // pred_region
        %s232 = ssub.s32 %s19, 1
        // Predicated region
        $region13: #{geo_localization_net.1} parent=11 // pred_check
          %p233 = pneg %p66
        $region14: #{geo_localization_net.1} parent=11 // pred_check_branch
          %235 = sbr.rel (%p233) target = $region16
        $region15: #{geo_localization_net.1} parent=11 // pred_region
          _
        $region16: #{geo_localization_net.1} parent=11 // pred_fallthru
          _
        // Predicated region
        $region17: #{geo_localization_net.1} parent=11 // pred_check
          %p236 = pneg %p87
        $region18: #{geo_localization_net.1} parent=11 // pred_check_branch
          %238 = sbr.rel (%p236) target = $region20
        $region19: #{geo_localization_net.1} parent=11 // pred_region
          _
        $region20: #{geo_localization_net.1} parent=11 // pred_fallthru
          _
        // Predicated region
        $region21: #{geo_localization_net.1} parent=11 // pred_check
          %p239 = pneg %p108
        $region22: #{geo_localization_net.1} parent=11 // pred_check_branch
          %241 = sbr.rel (%p239) target = $region24
        $region23: #{geo_localization_net.1} parent=11 // pred_region
          _
        $region24: #{geo_localization_net.1} parent=11 // pred_fallthru
          _
        // Predicated region
        $region25: #{geo_localization_net.1} parent=11 // pred_check
          %p242 = pneg %p129
        $region26: #{geo_localization_net.1} parent=11 // pred_check_branch
          %244 = sbr.rel (%p242) target = $region28
        $region27: #{geo_localization_net.1} parent=11 // pred_region
          _
        $region28: #{geo_localization_net.1} parent=11 // pred_fallthru
          _
        // Predicated region
        $region29: #{geo_localization_net.1} parent=11 // pred_check
          %p245 = pneg %p150
        $region30: #{geo_localization_net.1} parent=11 // pred_check_branch
          %247 = sbr.rel (%p245) target = $region32
        $region31: #{geo_localization_net.1} parent=11 // pred_region
          _
        $region32: #{geo_localization_net.1} parent=11 // pred_fallthru
          _
        // Predicated region
        $region33: #{geo_localization_net.1} parent=11 // pred_check
          %p248 = pneg %p171
        $region34: #{geo_localization_net.1} parent=11 // pred_check_branch
          %250 = sbr.rel (%p248) target = $region36
        $region35: #{geo_localization_net.1} parent=11 // pred_region
          _
        $region36: #{geo_localization_net.1} parent=11 // pred_fallthru
          _
        // Predicated region
        $region37: #{geo_localization_net.1} parent=11 // pred_check
          %p251 = pneg %p192
        $region38: #{geo_localization_net.1} parent=11 // pred_check_branch
          %253 = sbr.rel (%p251) target = $region40
        $region39: #{geo_localization_net.1} parent=11 // pred_region
          _
        $region40: #{geo_localization_net.1} parent=11 // pred_fallthru
          _
      $region12: #{geo_localization_net.1} parent=5 // pred_fallthru
        _
      %p254 = scmp.lt.s32.totalorder %s19, 2
      // Predicated region
      $region41: #{geo_localization_net.1} parent=5 // pred_check
        %p255 = pneg %p254
      $region42: #{geo_localization_net.1} parent=5 // pred_check_branch
        %257 = sbr.rel (%p255) target = $region44
      $region43: #{geo_localization_net.1} parent=5 // pred_region
        // Predicated region
        $region45: #{geo_localization_net.1} parent=43 // pred_check
          %p258 = pneg %p39
        $region46: #{geo_localization_net.1} parent=43 // pred_check_branch
          %260 = sbr.rel (%p258) target = $region48
        $region47: #{geo_localization_net.1} parent=43 // pred_region
          %p261 = scmp.lt.s32.totalorder %s19, 1
          %s262 = scalar_select %p261, %s19, 1
          %s263 = smul.addr %s262, 8
          %s264 = smul.addr %s263, 4
          %s265 = scalar_lea.vmem %s1, %s264
        $region48: #{geo_localization_net.1} parent=43 // pred_fallthru
          _
      $region44: #{geo_localization_net.1} parent=5 // pred_fallthru
        _
      %p266 = scmp.le.s32.totalorder 1, %s19
      %p267 = scmp.lt.s32.totalorder %s19, 3
      %p268 = pnand %p266, %p267
      %p269 = pneg %p268
      // Predicated region
      $region49: #{geo_localization_net.1} parent=5 // pred_check
        _
      $region50: #{geo_localization_net.1} parent=5 // pred_check_branch
        %271 = sbr.rel (%p268) target = $region52
      $region51: #{geo_localization_net.1} parent=5 // pred_region
        %s272 = ssub.s32 %s19, 1
        %p273 = scmp.lt.s32.totalorder %s24, 1
        %s274 = scalar_select %p273, %s24, 1
        %s275 = smul.addr %s274, 8
        %s276 = smul.addr %s275, 4
        %s277 = scalar_lea.vmem %s1, %s276
        %p278 = pneg %p45
        %p279 = pneg %p42
        %p280 = pneg %p66
        %p281 = pneg %p63
        %p282 = pneg %p87
        %p283 = pneg %p84
        %p284 = pneg %p108
        %p285 = pneg %p105
        %p286 = pneg %p129
        %p287 = pneg %p126
        %p288 = pneg %p150
        %p289 = pneg %p147
        %p290 = pneg %p171
        %p291 = pneg %p168
        %p292 = pneg %p192
        %p293 = pneg %p189
        %p294 = pneg %p218
        %p295 = pneg %p215
        %s296 = sand.u32 %s205, 1
        %s297 = scalar_lea.sflag [#allocation7], %s296
        %s298 = sand.u32 %s205, 1
        %s299 = scalar_lea.vmem [#allocation6], %s298
        %p300 = scmp.lt.s32.totalorder %s24, 1
        %s301 = scalar_select %p300, %s24, 1
        %s302 = smul.addr %s301, 8
        %s303 = smul.addr %s302, 4
        %s304 = scalar_lea.vmem %s1, %s303
        %v306 = vld [vmem:[%s304] sm:$0xf]
        %v307 = vld [vmem:[%s304 + $0x4] sm:$0xf]
        %v308 = vld [vmem:[%s304 + $0x8] sm:$0xf]
        %v309 = vld [vmem:[%s304 + $0xc] sm:$0xf]
        %v310 = vld [vmem:[%s304 + $0x10] sm:$0xf]
        %v311 = vld [vmem:[%s304 + $0x14] sm:$0xf]
        %v312 = vld [vmem:[%s304 + $0x18] sm:$0xf]
        %v313 = vld [vmem:[%s304 + $0x1c] sm:$0xf]
        %v314 = vld [vmem:[%s2] sm:$0xf]
        %v315 = vld [vmem:[%s2 + $0x4] sm:$0xf]
        %v316 = vld [vmem:[%s2 + $0x8] sm:$0xf]
        %v317 = vld [vmem:[%s2 + $0xc] sm:$0xf]
        %v318 = vld [vmem:[%s2 + $0x10] sm:$0xf]
        %v319 = vld [vmem:[%s2 + $0x14] sm:$0xf]
        %v320 = vld [vmem:[%s2 + $0x18] sm:$0xf]
        %v321 = vld [vmem:[%s2 + $0x1c] sm:$0xf]
        %v322 = vld [vmem:[%s2 + $0x20] sm:$0xf]
        %v323 = vld [vmem:[%s2 + $0x24] sm:$0xf]
        %v324 = vld [vmem:[%s2 + $0x28] sm:$0xf]
        %v325 = vld [vmem:[%s2 + $0x2c] sm:$0xf]
        %v326 = vld [vmem:[%s2 + $0x30] sm:$0xf]
        %v327 = vld [vmem:[%s2 + $0x34] sm:$0xf]
        %v328 = vld [vmem:[%s2 + $0x38] sm:$0xf]
        %v329 = vld [vmem:[%s2 + $0x3c] sm:$0xf]
        %v330 = vld [vmem:[%s3] sm:$0x1]
        %v332 = vlaneseq
        %v333 = vshrl.u32 %v332, 7
        %v334 = vsub.s32 0, %v333
        %v335 = vrot.slane %v330, %v334
        %v345 = vunpack.c.l.b16 %v306
        %v346 = vunpack.c.l.b16 %v307
        %v347 = vunpack.c.l.b16 %v308
        %v348 = vunpack.c.l.b16 %v309
        %v349 = vunpack.c.l.b16 %v310
        %v350 = vunpack.c.l.b16 %v311
        %v351 = vunpack.c.l.b16 %v312
        %v352 = vunpack.c.l.b16 %v313
        %v353 = vpack.c.b16 %v346, %v345
        %v354 = vpack.c.b16 %v348, %v347
        %v355 = vpack.c.b16 %v350, %v349
        %v356 = vpack.c.b16 %v352, %v351
        %v377 = vunpack.c.l.b16 %v314
        %v378 = vunpack.c.l.b16 %v315
        %v379 = vunpack.c.l.b16 %v316
        %v380 = vunpack.c.l.b16 %v317
        %v381 = vunpack.c.l.b16 %v318
        %v382 = vunpack.c.l.b16 %v319
        %v383 = vunpack.c.l.b16 %v320
        %v384 = vunpack.c.l.b16 %v321
        %v385 = vunpack.c.l.b16 %v322
        %v386 = vunpack.c.l.b16 %v323
        %v387 = vunpack.c.l.b16 %v324
        %v388 = vunpack.c.l.b16 %v325
        %v389 = vunpack.c.l.b16 %v326
        %v390 = vunpack.c.l.b16 %v327
        %v391 = vunpack.c.l.b16 %v328
        %v392 = vunpack.c.l.b16 %v329
        %v393 = vpack.c.b16 %v378, %v377
        %v394 = vpack.c.b16 %v380, %v379
        %v395 = vpack.c.b16 %v382, %v381
        %v396 = vpack.c.b16 %v384, %v383
        %v397 = vpack.c.b16 %v386, %v385
        %v398 = vpack.c.b16 %v388, %v387
        %v399 = vpack.c.b16 %v390, %v389
        %v400 = vpack.c.b16 %v392, %v391
        %409 = vmatprep.subr.bf16.mxu0 0
        %410 = vmatpush1.bf16.msra.mxu0 %v400
        %411 = vmatprep.subr.bf16.mxu0 0
        %412 = vmatpush1.bf16.msra.mxu0 %v399
        %413 = vmatprep.subr.bf16.mxu0 0
        %414 = vmatpush1.bf16.msra.mxu0 %v398
        %415 = vmatprep.subr.bf16.mxu0 0
        %416 = vmatpush1.bf16.msra.mxu0 %v397
        %417 = vmatprep.subr.bf16.mxu0 0
        %418 = vmatpush1.bf16.msra.mxu0 %v396
        %419 = vmatprep.subr.bf16.mxu0 0
        %420 = vmatpush1.bf16.msra.mxu0 %v395
        %421 = vmatprep.subr.bf16.mxu0 0
        %422 = vmatpush1.bf16.msra.mxu0 %v394
        %423 = vmatprep.subr.bf16.mxu0 0
        %424 = vmatpush1.bf16.msra.mxu0 %v393
        %425 = vmatprep.subr.bf16.mxu0 0
        %426 = vmatpush2.bf16.msra.mxu0 0
        %427 = vmatprep.subr.bf16.mxu0 0
        %428 = vmatpush2.bf16.msra.mxu0 0
        %429 = vmatprep.subr.bf16.mxu0 0
        %430 = vmatpush2.bf16.msra.mxu0 0
        %431 = vmatprep.subr.bf16.mxu0 0
        %432 = vmatpush2.bf16.msra.mxu0 0
        %433 = vmatprep.subr.bf16.mxu0 0
        %434 = vmatpush2.bf16.msra.mxu0 0
        %435 = vmatprep.subr.bf16.mxu0 0
        %436 = vmatpush2.bf16.msra.mxu0 0
        %437 = vmatprep.subr.bf16.mxu0 0
        %438 = vmatpush2.bf16.msra.mxu0 0
        %439 = vmatprep.subr.bf16.mxu0 0
        %440 = vmatpush2.bf16.msra.mxu0 0
        %441 = vmatprep.mubr.bf16.mxu0 0
        %442 = vmatmul.mubr.bf16.gmra.mxu0 %v353
        %v443 = vpop.f32.mrf.mxu0
        %v444 = vadd.f32 %v335, %v443
        %v445 = vpop.f32.mrf.mxu0
        %v446 = vpop.f32.mrf.mxu0
        %v447 = vadd.f32 %v335, %v446
        %v448 = vpop.f32.mrf.mxu0
        %449 = vmatprep.mubr.bf16.mxu0 0
        %450 = vmatmul.mubr.bf16.gmra.mxu0 %v354
        %v451 = vpop.f32.mrf.mxu0
        %v452 = vadd.f32 %v335, %v451
        %v453 = vpop.f32.mrf.mxu0
        %v454 = vpop.f32.mrf.mxu0
        %v455 = vadd.f32 %v335, %v454
        %v456 = vpop.f32.mrf.mxu0
        %457 = vmatprep.mubr.bf16.mxu0 0
        %458 = vmatmul.mubr.bf16.gmra.mxu0 %v355
        %v459 = vpop.f32.mrf.mxu0
        %v460 = vadd.f32 %v335, %v459
        %v461 = vpop.f32.mrf.mxu0
        %v462 = vpop.f32.mrf.mxu0
        %v463 = vadd.f32 %v335, %v462
        %v464 = vpop.f32.mrf.mxu0
        %465 = vmatprep.mubr.bf16.mxu0 0
        %466 = vmatmul.mubr.bf16.gmra.mxu0 %v356
        %v467 = vpop.f32.mrf.mxu0
        %v468 = vadd.f32 %v335, %v467
        %v469 = vpop.f32.mrf.mxu0
        %v470 = vpop.f32.mrf.mxu0
        %v471 = vadd.f32 %v335, %v470
        %v472 = vpop.f32.mrf.mxu0
        %473 = vdwg.mxu0
        %v474 = vmax.f32 %v444, 0.0
        %v475 = vmax.f32 %v447, 0.0
        %v476 = vmax.f32 %v452, 0.0
        %v477 = vmax.f32 %v455, 0.0
        %v478 = vmax.f32 %v460, 0.0
        %v479 = vmax.f32 %v463, 0.0
        %v480 = vmax.f32 %v468, 0.0
        %v481 = vmax.f32 %v471, 0.0
        %482 = vst [vmem:[#allocation2] sm:$0x1f] 0.0
        %483 = vst [vmem:[#allocation2 + $0x8] sm:$0x1f] 0.0
        %484 = vst [vmem:[#allocation2 + $0x10] sm:$0x1f] 0.0
        %485 = vst [vmem:[#allocation2 + $0x18] sm:$0x1f] 0.0
        %486 = vst [vmem:[#allocation2 + $0x20] sm:$0x1f] 0.0
        %v489 = vcombine.high %v474, %v474
        %v490 = vcombine.high %v475, %v475
        %491 = vrot.lane.b32.xlu0 %v474, 96
        %v492 = vpop.permute.xlu0 %491
        %493 = vrot.lane.b32.xlu0 %v489, 96
        %v494 = vpop.permute.xlu0 %493
        %495 = vrot.lane.b32.xlu0 %v475, 96
        %v496 = vpop.permute.xlu0 %495
        %497 = vrot.lane.b32.xlu0 %v490, 96
        %v498 = vpop.permute.xlu0 %497
        %vm503 = vcmask 1044224
        %504 = vst.msk [vmem:[#allocation2] sm:$0xf] %vm503, %v492
        %505 = vst.msk [vmem:[#allocation2 + $0x8] sm:$0xf] %vm503, %v494
        %506 = vst.msk [vmem:[#allocation2 + $0x10] sm:$0xf] %vm503, %v496
        %507 = vst.msk [vmem:[#allocation2 + $0x18] sm:$0xf] %vm503, %v498
        %v510 = vcombine.high %v476, %v476
        %v511 = vcombine.high %v477, %v477
        %512 = vrot.lane.b32.xlu0 %v476, 64
        %v513 = vpop.permute.xlu0 %512
        %514 = vrot.lane.b32.xlu0 %v510, 64
        %v515 = vpop.permute.xlu0 %514
        %516 = vrot.lane.b32.xlu0 %v477, 64
        %v517 = vpop.permute.xlu0 %516
        %518 = vrot.lane.b32.xlu0 %v511, 64
        %v519 = vpop.permute.xlu0 %518
        %vm524 = vcmask 781824
        %525 = vst.msk [vmem:[#allocation2 + $0x1] sm:$0xf] %vm524, %v513
        %526 = vst.msk [vmem:[#allocation2 + $0x9] sm:$0xf] %vm524, %v515
        %527 = vst.msk [vmem:[#allocation2 + $0x11] sm:$0xf] %vm524, %v517
        %528 = vst.msk [vmem:[#allocation2 + $0x19] sm:$0xf] %vm524, %v519
        %v531 = vcombine.high %v478, %v478
        %v532 = vcombine.high %v479, %v479
        %533 = vrot.lane.b32.xlu0 %v478, 32
        %v534 = vpop.permute.xlu0 %533
        %535 = vrot.lane.b32.xlu0 %v531, 32
        %v536 = vpop.permute.xlu0 %535
        %537 = vrot.lane.b32.xlu0 %v479, 32
        %v538 = vpop.permute.xlu0 %537
        %539 = vrot.lane.b32.xlu0 %v532, 32
        %v540 = vpop.permute.xlu0 %539
        %s545 = scalar_lea.vmem [#allocation2], 8
        %vm546 = vcmask 519424
        %547 = vst.msk [vmem:[%s545] sm:$0xf] %vm546, %v534
        %548 = vst.msk [vmem:[%s545 + $0x8] sm:$0xf] %vm546, %v536
        %549 = vst.msk [vmem:[%s545 + $0x10] sm:$0xf] %vm546, %v538
        %550 = vst.msk [vmem:[%s545 + $0x18] sm:$0xf] %vm546, %v540
        %v553 = vcombine.high %v480, %v480
        %v554 = vcombine.high %v481, %v481
        %vm557 = vcmask 257024
        %558 = vst.msk [vmem:[%s545 + $0x1] sm:$0xf] %vm557, %v480
        %559 = vst.msk [vmem:[%s545 + $0x9] sm:$0xf] %vm557, %v553
        %560 = vst.msk [vmem:[%s545 + $0x11] sm:$0xf] %vm557, %v481
        %561 = vst.msk [vmem:[%s545 + $0x19] sm:$0xf] %vm557, %v554
        %v562 = vld [vmem:[#allocation2] sm:$0xf]
        %v563 = vld [vmem:[#allocation2 + $0x8] sm:$0xf]
        %v564 = vld [vmem:[#allocation2 + $0x10] sm:$0xf]
        %v565 = vld [vmem:[#allocation2 + $0x18] sm:$0xf]
        %v570 = vcombine.low %v562, %v563
        %v571 = vcombine.low %v564, %v565
        %v574 = vpack.c.bf16 %v571, %v570
        %v575 = vld [vmem:[%s4] sm:$0xf]
        %v576 = vld [vmem:[%s4 + $0x4] sm:$0xf]
        %v577 = vld [vmem:[%s4 + $0x8] sm:$0xf]
        %v578 = vld [vmem:[%s4 + $0xc] sm:$0xf]
        %v579 = vld [vmem:[%s4 + $0x10] sm:$0xf]
        %v580 = vld [vmem:[%s4 + $0x14] sm:$0xf]
        %v581 = vld [vmem:[%s4 + $0x18] sm:$0xf]
        %v582 = vld [vmem:[%s4 + $0x1c] sm:$0xf]
        %v583 = vld [vmem:[%s4 + $0x20] sm:$0xf]
        %v584 = vld [vmem:[%s4 + $0x24] sm:$0xf]
        %v585 = vld [vmem:[%s4 + $0x28] sm:$0xf]
        %v586 = vld [vmem:[%s4 + $0x2c] sm:$0xf]
        %v587 = vld [vmem:[%s4 + $0x30] sm:$0xf]
        %v588 = vld [vmem:[%s4 + $0x34] sm:$0xf]
        %v589 = vld [vmem:[%s4 + $0x38] sm:$0xf]
        %v590 = vld [vmem:[%s4 + $0x3c] sm:$0xf]
        %v591 = vld [vmem:[#allocation2 + $0x1] sm:$0xf]
        %v592 = vld [vmem:[#allocation2 + $0x9] sm:$0xf]
        %v593 = vld [vmem:[#allocation2 + $0x11] sm:$0xf]
        %v594 = vld [vmem:[#allocation2 + $0x19] sm:$0xf]
        %v599 = vcombine.low %v591, %v592
        %v600 = vcombine.low %v593, %v594
        %v603 = vpack.c.bf16 %v600, %v599
        %s604 = scalar_lea.vmem %s4, 64
        %v605 = vld [vmem:[%s604] sm:$0xf]
        %v606 = vld [vmem:[%s604 + $0x4] sm:$0xf]
        %v607 = vld [vmem:[%s604 + $0x8] sm:$0xf]
        %v608 = vld [vmem:[%s604 + $0xc] sm:$0xf]
        %v609 = vld [vmem:[%s604 + $0x10] sm:$0xf]
        %v610 = vld [vmem:[%s604 + $0x14] sm:$0xf]
        %v611 = vld [vmem:[%s604 + $0x18] sm:$0xf]
        %v612 = vld [vmem:[%s604 + $0x1c] sm:$0xf]
        %v613 = vld [vmem:[%s604 + $0x20] sm:$0xf]
        %v614 = vld [vmem:[%s604 + $0x24] sm:$0xf]
        %v615 = vld [vmem:[%s604 + $0x28] sm:$0xf]
        %v616 = vld [vmem:[%s604 + $0x2c] sm:$0xf]
        %v617 = vld [vmem:[%s604 + $0x30] sm:$0xf]
        %v618 = vld [vmem:[%s604 + $0x34] sm:$0xf]
        %v619 = vld [vmem:[%s604 + $0x38] sm:$0xf]
        %v620 = vld [vmem:[%s604 + $0x3c] sm:$0xf]
        %v637 = vunpack.c.l.b16 %v605
        %v638 = vunpack.c.l.b16 %v606
        %v639 = vunpack.c.l.b16 %v607
        %v640 = vunpack.c.l.b16 %v608
        %v641 = vunpack.c.l.b16 %v609
        %v642 = vunpack.c.l.b16 %v610
        %v643 = vunpack.c.l.b16 %v611
        %v644 = vunpack.c.l.b16 %v612
        %v645 = vunpack.c.l.b16 %v613
        %v646 = vunpack.c.l.b16 %v614
        %v647 = vunpack.c.l.b16 %v615
        %v648 = vunpack.c.l.b16 %v616
        %v649 = vunpack.c.l.b16 %v617
        %v650 = vunpack.c.l.b16 %v618
        %v651 = vunpack.c.l.b16 %v619
        %v652 = vunpack.c.l.b16 %v620
        %v653 = vpack.c.b16 %v638, %v637
        %v654 = vpack.c.b16 %v640, %v639
        %v655 = vpack.c.b16 %v642, %v641
        %v656 = vpack.c.b16 %v644, %v643
        %v657 = vpack.c.b16 %v646, %v645
        %v658 = vpack.c.b16 %v648, %v647
        %v659 = vpack.c.b16 %v650, %v649
        %v660 = vpack.c.b16 %v652, %v651
        %669 = vmatprep.subr.bf16.mxu0 0
        %670 = vmatpush1.bf16.msra.mxu0 %v660
        %671 = vmatprep.subr.bf16.mxu0 0
        %672 = vmatpush1.bf16.msra.mxu0 %v659
        %673 = vmatprep.subr.bf16.mxu0 0
        %674 = vmatpush1.bf16.msra.mxu0 %v658
        %675 = vmatprep.subr.bf16.mxu0 0
        %676 = vmatpush1.bf16.msra.mxu0 %v657
        %677 = vmatprep.subr.bf16.mxu0 0
        %678 = vmatpush1.bf16.msra.mxu0 %v656
        %679 = vmatprep.subr.bf16.mxu0 0
        %680 = vmatpush1.bf16.msra.mxu0 %v655
        %681 = vmatprep.subr.bf16.mxu0 0
        %682 = vmatpush1.bf16.msra.mxu0 %v654
        %683 = vmatprep.subr.bf16.mxu0 0
        %684 = vmatpush1.bf16.msra.mxu0 %v653
        %685 = vmatprep.subr.bf16.mxu0 0
        %686 = vmatpush2.bf16.msra.mxu0 0
        %687 = vmatprep.subr.bf16.mxu0 0
        %688 = vmatpush2.bf16.msra.mxu0 0
        %689 = vmatprep.subr.bf16.mxu0 0
        %690 = vmatpush2.bf16.msra.mxu0 0
        %691 = vmatprep.subr.bf16.mxu0 0
        %692 = vmatpush2.bf16.msra.mxu0 0
        %693 = vmatprep.subr.bf16.mxu0 0
        %694 = vmatpush2.bf16.msra.mxu0 0
        %695 = vmatprep.subr.bf16.mxu0 0
        %696 = vmatpush2.bf16.msra.mxu0 0
        %697 = vmatprep.subr.bf16.mxu0 0
        %698 = vmatpush2.bf16.msra.mxu0 0
        %699 = vmatprep.subr.bf16.mxu0 0
        %700 = vmatpush2.bf16.msra.mxu0 0
        %701 = vmatprep.mubr.bf16.mxu0 0
        %702 = vmatmul.mubr.bf16.gmra.mxu0 %v603
        %v703 = vpop.f32.mrf.mxu0
        %v704 = vadd.f32 0.0, %v703
        %v705 = vpop.f32.mrf.mxu0
        %v706 = vpop.f32.mrf.mxu0
        %v707 = vadd.f32 0.0, %v706
        %v708 = vpop.f32.mrf.mxu0
        %709 = vdwg.mxu0
        %v726 = vunpack.c.l.b16 %v575
        %v727 = vunpack.c.l.b16 %v576
        %v728 = vunpack.c.l.b16 %v577
        %v729 = vunpack.c.l.b16 %v578
        %v730 = vunpack.c.l.b16 %v579
        %v731 = vunpack.c.l.b16 %v580
        %v732 = vunpack.c.l.b16 %v581
        %v733 = vunpack.c.l.b16 %v582
        %v734 = vunpack.c.l.b16 %v583
        %v735 = vunpack.c.l.b16 %v584
        %v736 = vunpack.c.l.b16 %v585
        %v737 = vunpack.c.l.b16 %v586
        %v738 = vunpack.c.l.b16 %v587
        %v739 = vunpack.c.l.b16 %v588
        %v740 = vunpack.c.l.b16 %v589
        %v741 = vunpack.c.l.b16 %v590
        %v742 = vpack.c.b16 %v727, %v726
        %v743 = vpack.c.b16 %v729, %v728
        %v744 = vpack.c.b16 %v731, %v730
        %v745 = vpack.c.b16 %v733, %v732
        %v746 = vpack.c.b16 %v735, %v734
        %v747 = vpack.c.b16 %v737, %v736
        %v748 = vpack.c.b16 %v739, %v738
        %v749 = vpack.c.b16 %v741, %v740
        %758 = vmatprep.subr.bf16.mxu0 0
        %759 = vmatpush1.bf16.msra.mxu0 %v749
        %760 = vmatprep.subr.bf16.mxu0 0
        %761 = vmatpush1.bf16.msra.mxu0 %v748
        %762 = vmatprep.subr.bf16.mxu0 0
        %763 = vmatpush1.bf16.msra.mxu0 %v747
        %764 = vmatprep.subr.bf16.mxu0 0
        %765 = vmatpush1.bf16.msra.mxu0 %v746
        %766 = vmatprep.subr.bf16.mxu0 0
        %767 = vmatpush1.bf16.msra.mxu0 %v745
        %768 = vmatprep.subr.bf16.mxu0 0
        %769 = vmatpush1.bf16.msra.mxu0 %v744
        %770 = vmatprep.subr.bf16.mxu0 0
        %771 = vmatpush1.bf16.msra.mxu0 %v743
        %772 = vmatprep.subr.bf16.mxu0 0
        %773 = vmatpush1.bf16.msra.mxu0 %v742
        %774 = vmatprep.subr.bf16.mxu0 0
        %775 = vmatpush2.bf16.msra.mxu0 0
        %776 = vmatprep.subr.bf16.mxu0 0
        %777 = vmatpush2.bf16.msra.mxu0 0
        %778 = vmatprep.subr.bf16.mxu0 0
        %779 = vmatpush2.bf16.msra.mxu0 0
        %780 = vmatprep.subr.bf16.mxu0 0
        %781 = vmatpush2.bf16.msra.mxu0 0
        %782 = vmatprep.subr.bf16.mxu0 0
        %783 = vmatpush2.bf16.msra.mxu0 0
        %784 = vmatprep.subr.bf16.mxu0 0
        %785 = vmatpush2.bf16.msra.mxu0 0
        %786 = vmatprep.subr.bf16.mxu0 0
        %787 = vmatpush2.bf16.msra.mxu0 0
        %788 = vmatprep.subr.bf16.mxu0 0
        %789 = vmatpush2.bf16.msra.mxu0 0
        %790 = vmatprep.mubr.bf16.mxu0 0
        %791 = vmatmul.mubr.bf16.gmra.mxu0 %v574
        %v792 = vpop.f32.mrf.mxu0
        %v793 = vadd.f32 %v704, %v792
        %v794 = vpop.f32.mrf.mxu0
        %v795 = vpop.f32.mrf.mxu0
        %v796 = vadd.f32 %v707, %v795
        %v797 = vpop.f32.mrf.mxu0
        %798 = vdwg.mxu0
        %v799 = vld [vmem:[%s545] sm:$0xf]
        %v800 = vld [vmem:[%s545 + $0x8] sm:$0xf]
        %v801 = vld [vmem:[%s545 + $0x10] sm:$0xf]
        %v802 = vld [vmem:[%s545 + $0x18] sm:$0xf]
        %v807 = vcombine.low %v799, %v800
        %v808 = vcombine.low %v801, %v802
        %v811 = vpack.c.bf16 %v808, %v807
        %s812 = scalar_lea.vmem %s4, 128
        %v813 = vld [vmem:[%s812] sm:$0xf]
        %v814 = vld [vmem:[%s812 + $0x4] sm:$0xf]
        %v815 = vld [vmem:[%s812 + $0x8] sm:$0xf]
        %v816 = vld [vmem:[%s812 + $0xc] sm:$0xf]
        %v817 = vld [vmem:[%s812 + $0x10] sm:$0xf]
        %v818 = vld [vmem:[%s812 + $0x14] sm:$0xf]
        %v819 = vld [vmem:[%s812 + $0x18] sm:$0xf]
        %v820 = vld [vmem:[%s812 + $0x1c] sm:$0xf]
        %v821 = vld [vmem:[%s812 + $0x20] sm:$0xf]
        %v822 = vld [vmem:[%s812 + $0x24] sm:$0xf]
        %v823 = vld [vmem:[%s812 + $0x28] sm:$0xf]
        %v824 = vld [vmem:[%s812 + $0x2c] sm:$0xf]
        %v825 = vld [vmem:[%s812 + $0x30] sm:$0xf]
        %v826 = vld [vmem:[%s812 + $0x34] sm:$0xf]
        %v827 = vld [vmem:[%s812 + $0x38] sm:$0xf]
        %v828 = vld [vmem:[%s812 + $0x3c] sm:$0xf]
        %v845 = vunpack.c.l.b16 %v813
        %v846 = vunpack.c.l.b16 %v814
        %v847 = vunpack.c.l.b16 %v815
        %v848 = vunpack.c.l.b16 %v816
        %v849 = vunpack.c.l.b16 %v817
        %v850 = vunpack.c.l.b16 %v818
        %v851 = vunpack.c.l.b16 %v819
        %v852 = vunpack.c.l.b16 %v820
        %v853 = vunpack.c.l.b16 %v821
        %v854 = vunpack.c.l.b16 %v822
        %v855 = vunpack.c.l.b16 %v823
        %v856 = vunpack.c.l.b16 %v824
        %v857 = vunpack.c.l.b16 %v825
        %v858 = vunpack.c.l.b16 %v826
        %v859 = vunpack.c.l.b16 %v827
        %v860 = vunpack.c.l.b16 %v828
        %v861 = vpack.c.b16 %v846, %v845
        %v862 = vpack.c.b16 %v848, %v847
        %v863 = vpack.c.b16 %v850, %v849
        %v864 = vpack.c.b16 %v852, %v851
        %v865 = vpack.c.b16 %v854, %v853
        %v866 = vpack.c.b16 %v856, %v855
        %v867 = vpack.c.b16 %v858, %v857
        %v868 = vpack.c.b16 %v860, %v859
        %877 = vmatprep.subr.bf16.mxu0 0
        %878 = vmatpush1.bf16.msra.mxu0 %v868
        %879 = vmatprep.subr.bf16.mxu0 0
        %880 = vmatpush1.bf16.msra.mxu0 %v867
        %881 = vmatprep.subr.bf16.mxu0 0
        %882 = vmatpush1.bf16.msra.mxu0 %v866
        %883 = vmatprep.subr.bf16.mxu0 0
        %884 = vmatpush1.bf16.msra.mxu0 %v865
        %885 = vmatprep.subr.bf16.mxu0 0
        %886 = vmatpush1.bf16.msra.mxu0 %v864
        %887 = vmatprep.subr.bf16.mxu0 0
        %888 = vmatpush1.bf16.msra.mxu0 %v863
        %889 = vmatprep.subr.bf16.mxu0 0
        %890 = vmatpush1.bf16.msra.mxu0 %v862
        %891 = vmatprep.subr.bf16.mxu0 0
        %892 = vmatpush1.bf16.msra.mxu0 %v861
        %893 = vmatprep.subr.bf16.mxu0 0
        %894 = vmatpush2.bf16.msra.mxu0 0
        %895 = vmatprep.subr.bf16.mxu0 0
        %896 = vmatpush2.bf16.msra.mxu0 0
        %897 = vmatprep.subr.bf16.mxu0 0
        %898 = vmatpush2.bf16.msra.mxu0 0
        %899 = vmatprep.subr.bf16.mxu0 0
        %900 = vmatpush2.bf16.msra.mxu0 0
        %901 = vmatprep.subr.bf16.mxu0 0
        %902 = vmatpush2.bf16.msra.mxu0 0
        %903 = vmatprep.subr.bf16.mxu0 0
        %904 = vmatpush2.bf16.msra.mxu0 0
        %905 = vmatprep.subr.bf16.mxu0 0
        %906 = vmatpush2.bf16.msra.mxu0 0
        %907 = vmatprep.subr.bf16.mxu0 0
        %908 = vmatpush2.bf16.msra.mxu0 0
        %909 = vmatprep.mubr.bf16.mxu0 0
        %910 = vmatmul.mubr.bf16.gmra.mxu0 %v811
        %v911 = vpop.f32.mrf.mxu0
        %v912 = vadd.f32 0.0, %v911
        %v913 = vpop.f32.mrf.mxu0
        %v914 = vpop.f32.mrf.mxu0
        %v915 = vadd.f32 0.0, %v914
        %v916 = vpop.f32.mrf.mxu0
        %917 = vdwg.mxu0
        %v918 = vadd.f32 %v793, %v912
        %v919 = vadd.f32 %v796, %v915
        %v920 = vld [vmem:[%s545 + $0x1] sm:$0xf]
        %v921 = vld [vmem:[%s545 + $0x9] sm:$0xf]
        %v922 = vld [vmem:[%s545 + $0x11] sm:$0xf]
        %v923 = vld [vmem:[%s545 + $0x19] sm:$0xf]
        %v928 = vcombine.low %v920, %v921
        %v929 = vcombine.low %v922, %v923
        %v932 = vpack.c.bf16 %v929, %v928
        %s933 = scalar_lea.vmem %s4, 192
        %v934 = vld [vmem:[%s933] sm:$0xf]
        %v935 = vld [vmem:[%s933 + $0x4] sm:$0xf]
        %v936 = vld [vmem:[%s933 + $0x8] sm:$0xf]
        %v937 = vld [vmem:[%s933 + $0xc] sm:$0xf]
        %v938 = vld [vmem:[%s933 + $0x10] sm:$0xf]
        %v939 = vld [vmem:[%s933 + $0x14] sm:$0xf]
        %v940 = vld [vmem:[%s933 + $0x18] sm:$0xf]
        %v941 = vld [vmem:[%s933 + $0x1c] sm:$0xf]
        %v942 = vld [vmem:[%s933 + $0x20] sm:$0xf]
        %v943 = vld [vmem:[%s933 + $0x24] sm:$0xf]
        %v944 = vld [vmem:[%s933 + $0x28] sm:$0xf]
        %v945 = vld [vmem:[%s933 + $0x2c] sm:$0xf]
        %v946 = vld [vmem:[%s933 + $0x30] sm:$0xf]
        %v947 = vld [vmem:[%s933 + $0x34] sm:$0xf]
        %v948 = vld [vmem:[%s933 + $0x38] sm:$0xf]
        %v949 = vld [vmem:[%s933 + $0x3c] sm:$0xf]
        %v966 = vunpack.c.l.b16 %v934
        %v967 = vunpack.c.l.b16 %v935
        %v968 = vunpack.c.l.b16 %v936
        %v969 = vunpack.c.l.b16 %v937
        %v970 = vunpack.c.l.b16 %v938
        %v971 = vunpack.c.l.b16 %v939
        %v972 = vunpack.c.l.b16 %v940
        %v973 = vunpack.c.l.b16 %v941
        %v974 = vunpack.c.l.b16 %v942
        %v975 = vunpack.c.l.b16 %v943
        %v976 = vunpack.c.l.b16 %v944
        %v977 = vunpack.c.l.b16 %v945
        %v978 = vunpack.c.l.b16 %v946
        %v979 = vunpack.c.l.b16 %v947
        %v980 = vunpack.c.l.b16 %v948
        %v981 = vunpack.c.l.b16 %v949
        %v982 = vpack.c.b16 %v967, %v966
        %v983 = vpack.c.b16 %v969, %v968
        %v984 = vpack.c.b16 %v971, %v970
        %v985 = vpack.c.b16 %v973, %v972
        %v986 = vpack.c.b16 %v975, %v974
        %v987 = vpack.c.b16 %v977, %v976
        %v988 = vpack.c.b16 %v979, %v978
        %v989 = vpack.c.b16 %v981, %v980
        %998 = vmatprep.subr.bf16.mxu0 0
        %999 = vmatpush1.bf16.msra.mxu0 %v989
        %1000 = vmatprep.subr.bf16.mxu0 0
        %1001 = vmatpush1.bf16.msra.mxu0 %v988
        %1002 = vmatprep.subr.bf16.mxu0 0
        %1003 = vmatpush1.bf16.msra.mxu0 %v987
        %1004 = vmatprep.subr.bf16.mxu0 0
        %1005 = vmatpush1.bf16.msra.mxu0 %v986
        %1006 = vmatprep.subr.bf16.mxu0 0
        %1007 = vmatpush1.bf16.msra.mxu0 %v985
        %1008 = vmatprep.subr.bf16.mxu0 0
        %1009 = vmatpush1.bf16.msra.mxu0 %v984
        %1010 = vmatprep.subr.bf16.mxu0 0
        %1011 = vmatpush1.bf16.msra.mxu0 %v983
        %1012 = vmatprep.subr.bf16.mxu0 0
        %1013 = vmatpush1.bf16.msra.mxu0 %v982
        %1014 = vmatprep.subr.bf16.mxu0 0
        %1015 = vmatpush2.bf16.msra.mxu0 0
        %1016 = vmatprep.subr.bf16.mxu0 0
        %1017 = vmatpush2.bf16.msra.mxu0 0
        %1018 = vmatprep.subr.bf16.mxu0 0
        %1019 = vmatpush2.bf16.msra.mxu0 0
        %1020 = vmatprep.subr.bf16.mxu0 0
        %1021 = vmatpush2.bf16.msra.mxu0 0
        %1022 = vmatprep.subr.bf16.mxu0 0
        %1023 = vmatpush2.bf16.msra.mxu0 0
        %1024 = vmatprep.subr.bf16.mxu0 0
        %1025 = vmatpush2.bf16.msra.mxu0 0
        %1026 = vmatprep.subr.bf16.mxu0 0
        %1027 = vmatpush2.bf16.msra.mxu0 0
        %1028 = vmatprep.subr.bf16.mxu0 0
        %1029 = vmatpush2.bf16.msra.mxu0 0
        %1030 = vmatprep.mubr.bf16.mxu0 0
        %1031 = vmatmul.mubr.bf16.gmra.mxu0 %v932
        %v1032 = vpop.f32.mrf.mxu0
        %v1033 = vadd.f32 0.0, %v1032
        %v1034 = vpop.f32.mrf.mxu0
        %v1035 = vpop.f32.mrf.mxu0
        %v1036 = vadd.f32 0.0, %v1035
        %v1037 = vpop.f32.mrf.mxu0
        %1038 = vdwg.mxu0
        %v1039 = vadd.f32 %v918, %v1033
        %v1040 = vadd.f32 %v919, %v1036
        %v1041 = vld [vmem:[%s5] sm:$0x1]
        %v1043 = vlaneseq
        %v1044 = vshrl.u32 %v1043, 7
        %v1045 = vsub.s32 0, %v1044
        %v1046 = vrot.slane %v1041, %v1045
        %v1048 = vadd.f32 %v1039, %v1046
        %v1049 = vadd.f32 %v1040, %v1046
        %v1050 = vmax.f32 %v1048, 0.0
        %v1051 = vmax.f32 %v1049, 0.0
        %v1052 = vmax.f32 %v1050, 1e-06
        %v1053 = vmax.f32 %v1051, 1e-06
        %v1054 = vld [vmem:[%s6] sm:$0x1]
        %s1055 = sld [smem:[#allocation5]]
        %p1056 = scmp.ne.s32.totalorder %s1055, 0
        // Predicated region
        $region53: #{geo_localization_net.1} parent=51 // pred_check
          %p1057 = pneg %p1056
        $region54: #{geo_localization_net.1} parent=51 // pred_check_branch
          %1059 = sbr.rel (%p1057) target = $region56
        $region55: #{geo_localization_net.1} parent=51 // pred_region
          %v1060 = vmul.f32 %v1052, %v1052
          %v1061 = vmul.f32 %v1053, %v1053
          %v1062 = vmul.f32 %v1060, %v1052
          %v1063 = vmul.f32 %v1061, %v1053
          %vm1064 = vcmask 523264
          %v1065 = vsel %vm1064, %v1062, 0.0
          %v1066 = vsel %vm1064, %v1063, 0.0
          %v1067 = vadd.f32 %v1065, %v1066
          %v1068 = vrot.slane %v1067, 4
          %v1069 = vadd.f32 %v1067, %v1068
          %v1070 = vrot.slane %v1069, 2
          %v1071 = vadd.f32 %v1069, %v1070
          %v1072 = vrot.slane %v1071, 1
          %v1073 = vadd.f32 %v1071, %v1072
          %vm1074 = vcmask 516096
          %1075 = vst.msk [vmem:[#allocation3] sm:$0x1] %vm1074, %v1073
        $region56: #{geo_localization_net.1} parent=51 // pred_fallthru
          _
        %p1076 = scmp.eq.s32.totalorder %s1055, 0
        // Predicated region
        $region57: #{geo_localization_net.1} parent=51 // pred_check
          %p1077 = pneg %p1076
        $region58: #{geo_localization_net.1} parent=51 // pred_check_branch
          %1079 = sbr.rel (%p1077) target = $region60
        $region59: #{geo_localization_net.1} parent=51 // pred_region
          %v1080 = vlog2.pop %v1052
          %v1081 = vmul.f32 %v1080, 0.6931472
          %v1082 = vlog2.pop %v1053
          %v1083 = vmul.f32 %v1082, 0.6931472
          %v1085 = vlaneseq
          %v1086 = vshrl.u32 %v1085, 7
          %v1087 = vsub.s32 0, %v1086
          %v1088 = vrot.slane %v1054, %v1087
          %v1090 = vmul.f32 %v1081, %v1088
          %v1091 = vmul.f32 %v1083, %v1088
          %v1092 = vmul.f32 %v1090, 1.442695
          %v1093 = vpow.pop %v1092
          %v1094 = vmul.f32 %v1091, 1.442695
          %v1095 = vpow.pop %v1094
          %vm1096 = vcmask 523264
          %v1097 = vsel %vm1096, %v1093, 0.0
          %v1098 = vsel %vm1096, %v1095, 0.0
          %v1099 = vadd.f32 %v1097, %v1098
          %v1100 = vrot.slane %v1099, 4
          %v1101 = vadd.f32 %v1099, %v1100
          %v1102 = vrot.slane %v1101, 2
          %v1103 = vadd.f32 %v1101, %v1102
          %v1104 = vrot.slane %v1103, 1
          %v1105 = vadd.f32 %v1103, %v1104
          %vm1106 = vcmask 516096
          %1107 = vst.msk [vmem:[#allocation3] sm:$0x1] %vm1106, %v1105
        $region60: #{geo_localization_net.1} parent=51 // pred_fallthru
          _
        %v1108 = vld [vmem:[#allocation3] sm:$0x1]
        %v1109 = vmul.f32 %v1108, 0.0625
        %v1110 = vlog2.pop %v1109
        %v1111 = vmul.f32 %v1110, 0.6931472
        %v1112 = vrcp.pop %v1054
        %v1113 = vmul.f32 %v1111, %v1112
        %v1114 = vmul.f32 %v1113, 1.442695
        %v1115 = vpow.pop %v1114
        %v1116 = vmul.f32 %v1115, %v1115
        %vm1117 = vcmask 516096
        %v1118 = vsel %vm1117, %v1116, 0.0
        %1119 = vadd.xlane.f32.xlu0 %v1118
        %v1120 = vpop.xlane.xlu0 %1119
        %v1121 = vmax.f32 %v1120, 1e-24
        %v1122 = vrsqrt.pop %v1121
        %v1123 = vmul.f32 %v1115, %v1122
        %v1124 = vpack.c.bf16 %v1123, %v1123
        %v1125 = vld [vmem:[%s7] sm:$0xf]
        %v1126 = vld [vmem:[%s7 + $0x4] sm:$0xf]
        %v1127 = vld [vmem:[%s7 + $0x8] sm:$0xf]
        %v1128 = vld [vmem:[%s7 + $0xc] sm:$0xf]
        %v1129 = vld [vmem:[%s7 + $0x10] sm:$0xf]
        %v1130 = vld [vmem:[%s7 + $0x14] sm:$0xf]
        %v1131 = vld [vmem:[%s7 + $0x18] sm:$0xf]
        %v1132 = vld [vmem:[%s7 + $0x1c] sm:$0xf]
        %v1133 = vld [vmem:[%s8] sm:$0x1]
        %v1142 = vunpack.c.l.b16 %v1125
        %v1143 = vunpack.c.l.b16 %v1126
        %v1144 = vunpack.c.l.b16 %v1127
        %v1145 = vunpack.c.l.b16 %v1128
        %v1146 = vunpack.c.l.b16 %v1129
        %v1147 = vunpack.c.l.b16 %v1130
        %v1148 = vunpack.c.l.b16 %v1131
        %v1149 = vunpack.c.l.b16 %v1132
        %v1150 = vpack.c.b16 %v1143, %v1142
        %v1151 = vpack.c.b16 %v1145, %v1144
        %v1152 = vpack.c.b16 %v1147, %v1146
        %v1153 = vpack.c.b16 %v1149, %v1148
        %vm1158 = vcmask 523264
        %v1160 = vsel %vm1158, %v1124, 0
        %1162 = vmatprep.subr.bf16.mxu0 0
        %1163 = vmatpush1.bf16.msra.mxu0 0
        %1164 = vmatprep.subr.bf16.mxu0 0
        %1165 = vmatpush1.bf16.msra.mxu0 0
        %1166 = vmatprep.subr.bf16.mxu0 0
        %1167 = vmatpush1.bf16.msra.mxu0 0
        %1168 = vmatprep.subr.bf16.mxu0 0
        %1169 = vmatpush1.bf16.msra.mxu0 0
        %1170 = vmatprep.subr.bf16.mxu0 0
        %1171 = vmatpush1.bf16.msra.mxu0 %v1153
        %1172 = vmatprep.subr.bf16.mxu0 0
        %1173 = vmatpush1.bf16.msra.mxu0 %v1152
        %1174 = vmatprep.subr.bf16.mxu0 0
        %1175 = vmatpush1.bf16.msra.mxu0 %v1151
        %1176 = vmatprep.subr.bf16.mxu0 0
        %1177 = vmatpush1.bf16.msra.mxu0 %v1150
        %1178 = vmatprep.subr.bf16.mxu0 0
        %1179 = vmatpush2.bf16.msra.mxu0 0
        %1180 = vmatprep.subr.bf16.mxu0 0
        %1181 = vmatpush2.bf16.msra.mxu0 0
        %1182 = vmatprep.subr.bf16.mxu0 0
        %1183 = vmatpush2.bf16.msra.mxu0 0
        %1184 = vmatprep.subr.bf16.mxu0 0
        %1185 = vmatpush2.bf16.msra.mxu0 0
        %1186 = vmatprep.subr.bf16.mxu0 0
        %1187 = vmatpush2.bf16.msra.mxu0 0
        %1188 = vmatprep.subr.bf16.mxu0 0
        %1189 = vmatpush2.bf16.msra.mxu0 0
        %1190 = vmatprep.subr.bf16.mxu0 0
        %1191 = vmatpush2.bf16.msra.mxu0 0
        %1192 = vmatprep.subr.bf16.mxu0 0
        %1193 = vmatpush2.bf16.msra.mxu0 0
        %1194 = vmatprep.mubr.bf16.mxu0 0
        %1195 = vmatmul.mubr.bf16.gmra.mxu0 %v1160
        %v1196 = vpop.f32.mrf.mxu0
        %v1197 = vadd.f32 %v1133, %v1196
        %v1198 = vpop.f32.mrf.mxu0
        %v1199 = vpop.f32.mrf.mxu0
        %v1200 = vpop.f32.mrf.mxu0
        %1201 = vdwg.mxu0
        %v1202 = vmul.f32 %v1197, %v1197
        %vm1203 = vcmask 1040384
        %v1204 = vsel %vm1203, %v1202, 0.0
        %1205 = vadd.xlane.f32.xlu0 %v1204
        %v1206 = vpop.xlane.xlu0 %1205
        %v1207 = vmax.f32 %v1206, 1e-24
        %v1208 = vrsqrt.pop %v1207
        %v1209 = vmul.f32 %v1197, %v1208
        %1210 = vst [vmem:[%s299] sm:$0x1] %v1209
        %s1211 = sand.u32 %s205, 1
        %s1212 = scalar_lea.sflag [#allocation7], %s1211
        %s1213 = sand.u32 %s205, 1
        %s1214 = scalar_lea.vmem [#allocation6], %s1213
        // Predicated region
        $region61: #{geo_localization_net.1} parent=51 // pred_check
          %p1215 = pneg %p215
        $region62: #{geo_localization_net.1} parent=51 // pred_check_branch
          %1217 = sbr.rel (%p1215) target = $region64
        $region63: #{geo_localization_net.1} parent=51 // pred_region
          %s1219 = ssub.s32 16, 16
          %1220 = vsyncadd %s1212, %s1219
          %s1221 = smul.addr %s24, 16
          %s1222 = scalar_lea.hbm %s9, %s1221
          %s1224 = sshll.u32 %s1214, 4
          %s1225 = int_to_ptr.vmem [resolvable:$true] %s1224
          %1227 = dma.vmem_to_hbm [thread:$0]  %s1225, 16, %s1222, %s1212
        $region64: #{geo_localization_net.1} parent=51 // pred_fallthru
          _
      $region52: #{geo_localization_net.1} parent=5 // pred_fallthru
        _
      %p1228 = scmp.le.s32.totalorder 2, %s19
      // Predicated region
      $region65: #{geo_localization_net.1} parent=5 // pred_check
        %p1229 = pneg %p1228
      $region66: #{geo_localization_net.1} parent=5 // pred_check_branch
        %1231 = sbr.rel (%p1229) target = $region68
      $region67: #{geo_localization_net.1} parent=5 // pred_region
        %s1232 = ssub.s32 %s19, 2
        // Predicated region
        $region69: #{geo_localization_net.1} parent=67 // pred_check
          %p1233 = pneg %p221
        $region70: #{geo_localization_net.1} parent=67 // pred_check_branch
          %1235 = sbr.rel (%p1233) target = $region72
        $region71: #{geo_localization_net.1} parent=67 // pred_region
          %s1236 = sand.u32 %s206, 1
          %s1237 = scalar_lea.sflag [#allocation7], %s1236
          %s1238 = sand.u32 %s206, 1
          %s1239 = scalar_lea.vmem [#allocation6], %s1238
          %1240 = dma.done %s1237, 16
        $region72: #{geo_localization_net.1} parent=67 // pred_fallthru
          _
      $region68: #{geo_localization_net.1} parent=5 // pred_fallthru
        _
    $region6: #{geo_localization_net.1} parent=1 // loop_footer
      %s23 = sadd.s32 1, %s19
    $region7: #{geo_localization_net.1} parent=1 // loop_footer_branch
      %18 = sbr.rel target = $region3
    $region8: #{geo_localization_net.1} parent=1 // loop_exit
      _
    %1241 = vsyncpa [#allocation7], 1
    %s1242 = scalar_lea.sflag [#allocation7], 1
    %1243 = vsyncpa %s1242, 1

</llo_original>
